<compile_context>
chip_gen: v5e
topology: v5e:2x2
jax: 0.10.0
libtpu: 0.0.40
codegen_flags: <defaults>
</compile_context>

<pallas_src>
import functools

import jax
import jax.numpy as jnp
from jax.experimental import pallas as pl
from jax.experimental.pallas import tpu as pltpu


def _cross_attn_kernel(q_in_ref, kv_in_ref,
                       wq_ref, wk_ref, wv_ref, wo_ref,
                       bq_ref, bk_ref, bv_ref, bo_ref,
                       gamma_ref, beta_ref,
                       out_ref,
                       *, n_heads: int, eps: float):
    """One grid step == (one batch element, one query tile).

    q_in_ref : (1, TL, d)  query-side tile (also the residual stream), f32
    kv_in_ref: (1, I, d)   key/value-side sequence, f32
    w*_ref   : (d, d)      projection weights, bf16 (x @ W convention)
    b*_ref   : (1, d)      projection biases, f32
    gamma/beta: (1, d)     LayerNorm affine params, f32
    out_ref  : (1, TL, d)  LayerNorm(q_in + MHA(q_in, kv_in, kv_in))
    """
    x = q_in_ref[0].astype(jnp.float32)         # (TL, d) residual stream
    kv = kv_in_ref[0].astype(jnp.float32)       # (I, d)
    tl, d = x.shape
    i_len = kv.shape[0]
    hd = d // n_heads
    scale = 1.0 / jnp.sqrt(jnp.float32(hd))

    # hoist small broadcast operands (read once per kernel body)
    bq = bq_ref[0]
    bk = bk_ref[0]
    bv = bv_ref[0]
    bo = bo_ref[0]
    gamma = gamma_ref[0]
    beta = beta_ref[0]

    x_bf = x.astype(jnp.bfloat16)
    kv_bf = kv.astype(jnp.bfloat16)

    # --- input projections: bf16 operands, f32 accumulation on the MXU ---
    q = jnp.dot(x_bf, wq_ref[...], preferred_element_type=jnp.float32) + bq
    k = jnp.dot(kv_bf, wk_ref[...], preferred_element_type=jnp.float32) + bk
    v = jnp.dot(kv_bf, wv_ref[...], preferred_element_type=jnp.float32) + bv

    # --- split heads once: (S, d) -> (H, S, hd), no per-head lane slicing ---
    qh = jnp.transpose(q.reshape(tl, n_heads, hd), (1, 0, 2)).astype(jnp.bfloat16)
    kh = jnp.transpose(k.reshape(i_len, n_heads, hd), (1, 0, 2)).astype(jnp.bfloat16)
    vh = jnp.transpose(v.reshape(i_len, n_heads, hd), (1, 0, 2)).astype(jnp.bfloat16)

    # --- batched scaled dot-product attention over all heads ---
    s = jnp.einsum("hld,hid->hli", qh, kh,
                   preferred_element_type=jnp.float32) * scale      # (H, TL, I)
    s = s - jnp.max(s, axis=-1, keepdims=True)
    e = jnp.exp(s)
    p = e * pl.reciprocal(jnp.sum(e, axis=-1, keepdims=True), approx=True)
    o = jnp.einsum("hli,hid->hld", p.astype(jnp.bfloat16), vh,
                   preferred_element_type=jnp.float32)               # (H, TL, hd)
    attn = jnp.transpose(o, (1, 0, 2)).reshape(tl, d)                # (TL, d)

    # --- output projection ---
    attn = jnp.dot(attn.astype(jnp.bfloat16), wo_ref[...],
                   preferred_element_type=jnp.float32) + bo

    # --- residual + LayerNorm (f32) ---
    y = x + attn
    mean = jnp.mean(y, axis=-1, keepdims=True)
    yc = y - mean
    var = jnp.mean(yc * yc, axis=-1, keepdims=True)
    y_norm = yc * jax.lax.rsqrt(var + eps)
    out_ref[0] = (y_norm * gamma + beta).astype(out_ref.dtype)


def cross_attn_block(q_in, kv_in, params, *, n_heads: int, eps: float = 1e-5,
                     max_q_tile: int = 256,
                     vmem_limit_bytes: int = 48 * 1024 * 1024):
    """LayerNorm(q_in + MHA(query=q_in, key=kv_in, value=kv_in))."""
    B, L, d = q_in.shape
    _, I, _ = kv_in.shape
    assert d % n_heads == 0, "d_model must be divisible by n_heads"

    # Query-sequence tiling (bounds per-step VMEM, feeds both v7x TCs).
    if L <= max_q_tile:
        tl = L                        # single full-extent tile
        l_pad = L
    else:
        tl = max_q_tile               # multiple of 8
        l_pad = pl.cdiv(L, tl) * tl
    if l_pad != L:
        # padded query rows are computed (independent of valid rows) and
        # sliced off afterwards.
        q_in = jnp.pad(q_in, ((0, 0), (0, l_pad - L), (0, 0)))
    n_l_tiles = l_pad // tl

    # bf16 weights: MXU-native operands, half the HBM/VMEM footprint.
    wq = params["wq"].astype(jnp.bfloat16)
    wk = params["wk"].astype(jnp.bfloat16)
    wv = params["wv"].astype(jnp.bfloat16)
    wo = params["wo"].astype(jnp.bfloat16)

    # Constant operands: whole array resident in VMEM, single buffer (the
    # grid pipeline would otherwise double-buffer blocks whose index never
    # changes, doubling resident weight VMEM for nothing).
    const_spec = pl.BlockSpec(memory_space=pltpu.MemorySpace.VMEM)

    kernel = functools.partial(_cross_attn_kernel, n_heads=n_heads, eps=eps)

    out = pl.pallas_call(
        kernel,
        out_shape=jax.ShapeDtypeStruct((B, l_pad, d), q_in.dtype),
        grid_spec=pltpu.PrefetchScalarGridSpec(
            num_scalar_prefetch=0,
            grid=(B, n_l_tiles),
            in_specs=[
                pl.BlockSpec((1, tl, d), lambda b, l: (b, l, 0)),   # q_in tile
                pl.BlockSpec((1, I, d), lambda b, l: (b, 0, 0)),    # kv_in
                const_spec, const_spec, const_spec, const_spec,     # Wq Wk Wv Wo
                const_spec, const_spec, const_spec, const_spec,     # bq bk bv bo
                const_spec, const_spec,                             # gamma beta
            ],
            out_specs=pl.BlockSpec((1, tl, d), lambda b, l: (b, l, 0)),
        ),
        compiler_params=pltpu.CompilerParams(
            dimension_semantics=("parallel", "parallel"),
            vmem_limit_bytes=vmem_limit_bytes),
    )(q_in, kv_in,
      wq, wk, wv, wo,
      params["bq"], params["bk"], params["bv"], params["bo"],
      params["gamma"], params["beta"])

    if l_pad != L:
        out = out[:, :L, :]
    return out


def make_attn_params(key, d_model):
    ks = jax.random.split(key, 8)
    s = 0.05
    return {
        "wq": s * jax.random.normal(ks[0], (d_model, d_model), jnp.float32),
        "wk": s * jax.random.normal(ks[1], (d_model, d_model), jnp.float32),
        "wv": s * jax.random.normal(ks[2], (d_model, d_model), jnp.float32),
        "wo": s * jax.random.normal(ks[3], (d_model, d_model), jnp.float32),
        "bq": s * jax.random.normal(ks[4], (1, d_model), jnp.float32),
        "bk": s * jax.random.normal(ks[5], (1, d_model), jnp.float32),
        "bv": s * jax.random.normal(ks[6], (1, d_model), jnp.float32),
        "bo": s * jax.random.normal(ks[7], (1, d_model), jnp.float32),
        "gamma": jnp.ones((1, d_model), jnp.float32),
        "beta": jnp.zeros((1, d_model), jnp.float32),
    }


def cross_attention_fusion(text_emb, img_emb, params_t2i, params_i2t, *, n_heads):
    """Pallas implementation of CrossAttentionFusion.forward (masks=None)."""
    # NOTE: t2i and i2t are kept as two pallas_calls because L != I; each call
    # already exposes a (B, L_tiles) parallel grid for megacore sharding.
    text_out = cross_attn_block(text_emb, img_emb, params_t2i, n_heads=n_heads)
    img_out = cross_attn_block(img_emb, text_emb, params_i2t, n_heads=n_heads)
    return text_out, img_out


# ---------------- pure-JAX reference for sanity checking ----------------
def _ref_block(q_in, kv_in, p, n_heads, eps=1e-5):
    B, L, d = q_in.shape
    I = kv_in.shape[1]
    hd = d // n_heads
    q = q_in @ p["wq"] + p["bq"][0]
    k = kv_in @ p["wk"] + p["bk"][0]
    v = kv_in @ p["wv"] + p["bv"][0]
    q = q.reshape(B, L, n_heads, hd).transpose(0, 2, 1, 3)
    k = k.reshape(B, I, n_heads, hd).transpose(0, 2, 1, 3)
    v = v.reshape(B, I, n_heads, hd).transpose(0, 2, 1, 3)
    scores = jnp.einsum("bhld,bhid->bhli", q, k) / jnp.sqrt(jnp.float32(hd))
    pattn = jax.nn.softmax(scores, axis=-1)
    out = jnp.einsum("bhli,bhid->bhld", pattn, v)
    out = out.transpose(0, 2, 1, 3).reshape(B, L, d)
    out = out @ p["wo"] + p["bo"][0]
    y = q_in + out
    mean = y.mean(-1, keepdims=True)
    var = ((y - mean) ** 2).mean(-1, keepdims=True)
    return (y - mean) / jnp.sqrt(var + eps) * p["gamma"][0] + p["beta"][0]


if __name__ == "__main__":
    B, L, I, D, H = 2, 8, 4, 32, 4

    key = jax.random.PRNGKey(0)
    k_text, k_img, k_p1, k_p2 = jax.random.split(key, 4)
    text_emb = jax.random.normal(k_text, (B, L, D), jnp.float32)
    img_emb = jax.random.normal(k_img, (B, I, D), jnp.float32)

    params_t2i = make_attn_params(k_p1, D)
    params_i2t = make_attn_params(k_p2, D)

    text_out, img_out = cross_attention_fusion(
        text_emb, img_emb, params_t2i, params_i2t, n_heads=H)
    jax.block_until_ready((text_out, img_out))

    # sanity check against pure-JAX f32 reference (kernel matmuls are bf16,
    # so use a bf16-appropriate tolerance).
    text_ref = _ref_block(text_emb, img_emb, params_t2i, H)
    img_ref = _ref_block(img_emb, text_emb, params_i2t, H)
    err_t = float(jnp.max(jnp.abs(text_out - text_ref)))
    err_i = float(jnp.max(jnp.abs(img_out - img_ref)))
    assert jnp.allclose(text_out, text_ref, atol=3e-2, rtol=3e-2), err_t
    assert jnp.allclose(img_out, img_ref, atol=3e-2, rtol=3e-2), err_i

    print("KERNEL_OK")
</pallas_src>

<mosaic_0001>
module attributes {stable_mosaic.version = 11 : i64} {
  func.func @_cross_attn_kernel(%arg0: i32, %arg1: i32, %arg2: memref<1x8x32xf32, #tpu.memory_space<vmem>>, %arg3: memref<1x4x32xf32, #tpu.memory_space<vmem>>, %arg4: memref<32x32xbf16, #tpu.memory_space<vmem>>, %arg5: memref<32x32xbf16, #tpu.memory_space<vmem>>, %arg6: memref<32x32xbf16, #tpu.memory_space<vmem>>, %arg7: memref<32x32xbf16, #tpu.memory_space<vmem>>, %arg8: memref<1x32xf32, #tpu.memory_space<vmem>>, %arg9: memref<1x32xf32, #tpu.memory_space<vmem>>, %arg10: memref<1x32xf32, #tpu.memory_space<vmem>>, %arg11: memref<1x32xf32, #tpu.memory_space<vmem>>, %arg12: memref<1x32xf32, #tpu.memory_space<vmem>>, %arg13: memref<1x32xf32, #tpu.memory_space<vmem>>, %arg14: memref<1x8x32xf32, #tpu.memory_space<vmem>>) attributes {dimension_semantics = [#tpu.dimension_semantics<parallel>, #tpu.dimension_semantics<parallel>], iteration_bounds = array<i64: 2, 1>, scalar_prefetch = 0 : i64, scratch_operands = 0 : i64, tpu.core_type = #tpu.core_type<tc>, window_params = [{transform_indices = @transform_0, window_bounds = array<i64: 1, 8, 32>}, {transform_indices = @transform_1, window_bounds = array<i64: 1, 4, 32>}, {pipeline_mode = #tpu.pipeline_mode<synchronous>, transform_indices = @transform_2, window_bounds = array<i64: 32, 32>}, {pipeline_mode = #tpu.pipeline_mode<synchronous>, transform_indices = @transform_3, window_bounds = array<i64: 32, 32>}, {pipeline_mode = #tpu.pipeline_mode<synchronous>, transform_indices = @transform_4, window_bounds = array<i64: 32, 32>}, {pipeline_mode = #tpu.pipeline_mode<synchronous>, transform_indices = @transform_5, window_bounds = array<i64: 32, 32>}, {pipeline_mode = #tpu.pipeline_mode<synchronous>, transform_indices = @transform_6, window_bounds = array<i64: 1, 32>}, {pipeline_mode = #tpu.pipeline_mode<synchronous>, transform_indices = @transform_7, window_bounds = array<i64: 1, 32>}, {pipeline_mode = #tpu.pipeline_mode<synchronous>, transform_indices = @transform_8, window_bounds = array<i64: 1, 32>}, {pipeline_mode = #tpu.pipeline_mode<synchronous>, transform_indices = @transform_9, window_bounds = array<i64: 1, 32>}, {pipeline_mode = #tpu.pipeline_mode<synchronous>, transform_indices = @transform_10, window_bounds = array<i64: 1, 32>}, {pipeline_mode = #tpu.pipeline_mode<synchronous>, transform_indices = @transform_11, window_bounds = array<i64: 1, 32>}, {transform_indices = @transform_12, window_bounds = array<i64: 1, 8, 32>}]} {
    %c0 = arith.constant 0 : index
    %c0_0 = arith.constant 0 : index
    %c0_1 = arith.constant 0 : index
    %0 = vector.load %arg2[%c0, %c0_0, %c0_1] : memref<1x8x32xf32, #tpu.memory_space<vmem>>, vector<1x8x32xf32>
    %1 = vector.shape_cast %0 : vector<1x8x32xf32> to vector<8x32xf32>
    %c0_2 = arith.constant 0 : index
    %c0_3 = arith.constant 0 : index
    %c0_4 = arith.constant 0 : index
    %2 = vector.load %arg3[%c0_2, %c0_3, %c0_4] : memref<1x4x32xf32, #tpu.memory_space<vmem>>, vector<1x4x32xf32>
    %3 = vector.shape_cast %2 : vector<1x4x32xf32> to vector<4x32xf32>
    %cst = arith.constant 8.000000e+00 : f32
    %4 = math.sqrt %cst : f32
    %cst_5 = arith.constant 1.000000e+00 : f32
    %5 = arith.divf %cst_5, %4 : f32
    %c0_6 = arith.constant 0 : index
    %c0_7 = arith.constant 0 : index
    %6 = vector.load %arg8[%c0_6, %c0_7] : memref<1x32xf32, #tpu.memory_space<vmem>>, vector<1x32xf32>
    %7 = vector.shape_cast %6 : vector<1x32xf32> to vector<32xf32>
    %c0_8 = arith.constant 0 : index
    %c0_9 = arith.constant 0 : index
    %8 = vector.load %arg9[%c0_8, %c0_9] : memref<1x32xf32, #tpu.memory_space<vmem>>, vector<1x32xf32>
    %9 = vector.shape_cast %8 : vector<1x32xf32> to vector<32xf32>
    %c0_10 = arith.constant 0 : index
    %c0_11 = arith.constant 0 : index
    %10 = vector.load %arg10[%c0_10, %c0_11] : memref<1x32xf32, #tpu.memory_space<vmem>>, vector<1x32xf32>
    %11 = vector.shape_cast %10 : vector<1x32xf32> to vector<32xf32>
    %c0_12 = arith.constant 0 : index
    %c0_13 = arith.constant 0 : index
    %12 = vector.load %arg11[%c0_12, %c0_13] : memref<1x32xf32, #tpu.memory_space<vmem>>, vector<1x32xf32>
    %13 = vector.shape_cast %12 : vector<1x32xf32> to vector<32xf32>
    %c0_14 = arith.constant 0 : index
    %c0_15 = arith.constant 0 : index
    %14 = vector.load %arg12[%c0_14, %c0_15] : memref<1x32xf32, #tpu.memory_space<vmem>>, vector<1x32xf32>
    %15 = vector.shape_cast %14 : vector<1x32xf32> to vector<32xf32>
    %c0_16 = arith.constant 0 : index
    %c0_17 = arith.constant 0 : index
    %16 = vector.load %arg13[%c0_16, %c0_17] : memref<1x32xf32, #tpu.memory_space<vmem>>, vector<1x32xf32>
    %17 = vector.shape_cast %16 : vector<1x32xf32> to vector<32xf32>
    %18 = arith.truncf %1 : vector<8x32xf32> to vector<8x32xbf16>
    %19 = arith.truncf %3 : vector<4x32xf32> to vector<4x32xbf16>
    %c0_18 = arith.constant 0 : index
    %c0_19 = arith.constant 0 : index
    %20 = vector.load %arg4[%c0_18, %c0_19] : memref<32x32xbf16, #tpu.memory_space<vmem>>, vector<32x32xbf16>
    %cst_20 = arith.constant dense<0.000000e+00> : vector<8x32xf32>
    %21 = tpu.matmul %18, %20, %cst_20 {dimension_numbers = #tpu.dot_dimension_numbers<[1], [0], [0], [1], [0, 0, 1, 1], [], []>} : vector<8x32xbf16>, vector<32x32xbf16>, vector<8x32xf32> -> vector<8x32xf32>
    %22 = vector.shape_cast %7 : vector<32xf32> to vector<1x32xf32>
    %23 = vector.broadcast %22 : vector<1x32xf32> to vector<8x32xf32>
    %24 = arith.addf %21, %23 : vector<8x32xf32>
    %c0_21 = arith.constant 0 : index
    %c0_22 = arith.constant 0 : index
    %25 = vector.load %arg5[%c0_21, %c0_22] : memref<32x32xbf16, #tpu.memory_space<vmem>>, vector<32x32xbf16>
    %cst_23 = arith.constant dense<0.000000e+00> : vector<4x32xf32>
    %26 = tpu.matmul %19, %25, %cst_23 {dimension_numbers = #tpu.dot_dimension_numbers<[1], [0], [0], [1], [0, 0, 1, 1], [], []>} : vector<4x32xbf16>, vector<32x32xbf16>, vector<4x32xf32> -> vector<4x32xf32>
    %27 = vector.shape_cast %9 : vector<32xf32> to vector<1x32xf32>
    %28 = vector.broadcast %27 : vector<1x32xf32> to vector<4x32xf32>
    %29 = arith.addf %26, %28 : vector<4x32xf32>
    %c0_24 = arith.constant 0 : index
    %c0_25 = arith.constant 0 : index
    %30 = vector.load %arg6[%c0_24, %c0_25] : memref<32x32xbf16, #tpu.memory_space<vmem>>, vector<32x32xbf16>
    %cst_26 = arith.constant dense<0.000000e+00> : vector<4x32xf32>
    %31 = tpu.matmul %19, %30, %cst_26 {dimension_numbers = #tpu.dot_dimension_numbers<[1], [0], [0], [1], [0, 0, 1, 1], [], []>} : vector<4x32xbf16>, vector<32x32xbf16>, vector<4x32xf32> -> vector<4x32xf32>
    %32 = vector.shape_cast %11 : vector<32xf32> to vector<1x32xf32>
    %33 = vector.broadcast %32 : vector<1x32xf32> to vector<4x32xf32>
    %34 = arith.addf %31, %33 : vector<4x32xf32>
    %35 = vector.shape_cast %24 : vector<8x32xf32> to vector<8x4x8xf32>
    %36 = tpu.transpose %35, [1, 0, 2] : vector<8x4x8xf32> -> vector<4x8x8xf32>
    %37 = arith.truncf %36 : vector<4x8x8xf32> to vector<4x8x8xbf16>
    %38 = vector.shape_cast %29 : vector<4x32xf32> to vector<4x4x8xf32>
    %39 = tpu.transpose %38, [1, 0, 2] : vector<4x4x8xf32> -> vector<4x4x8xf32>
    %40 = arith.truncf %39 : vector<4x4x8xf32> to vector<4x4x8xbf16>
    %41 = vector.shape_cast %34 : vector<4x32xf32> to vector<4x4x8xf32>
    %42 = tpu.transpose %41, [1, 0, 2] : vector<4x4x8xf32> -> vector<4x4x8xf32>
    %43 = arith.truncf %42 : vector<4x4x8xf32> to vector<4x4x8xbf16>
    "tpu.trace_start"() <{level = 10 : i32, message = "hld,hid->hli"}> : () -> ()
    %cst_27 = arith.constant dense<0.000000e+00> : vector<4x8x4xf32>
    %44 = tpu.matmul %37, %40, %cst_27 {dimension_numbers = #tpu.dot_dimension_numbers<[2], [2], [1], [1], [0, 0, 0, 1, 1, 1], [0], [0]>} : vector<4x8x8xbf16>, vector<4x4x8xbf16>, vector<4x8x4xf32> -> vector<4x8x4xf32>
    "tpu.trace_stop"() : () -> ()
    %45 = vector.broadcast %5 : f32 to vector<4x8x4xf32>
    %46 = arith.mulf %44, %45 : vector<4x8x4xf32>
    %cst_28 = arith.constant dense<0xFF800000> : vector<4x8xf32>
    %47 = vector.multi_reduction <maximumf>, %46, %cst_28 [2] : vector<4x8x4xf32> to vector<4x8xf32>
    %48 = vector.shape_cast %47 : vector<4x8xf32> to vector<4x8x1xf32>
    %49 = vector.broadcast %48 : vector<4x8x1xf32> to vector<4x8x4xf32>
    %50 = arith.subf %46, %49 : vector<4x8x4xf32>
    %51 = math.exp %50 : vector<4x8x4xf32>
    %cst_29 = arith.constant dense<0.000000e+00> : vector<4x8xf32>
    %52 = vector.multi_reduction <add>, %51, %cst_29 [2] : vector<4x8x4xf32> to vector<4x8xf32>
    %53 = vector.shape_cast %52 : vector<4x8xf32> to vector<4x8x1xf32>
    %54 = tpu.reciprocal %53 {approx = true} : vector<4x8x1xf32> -> vector<4x8x1xf32>
    %55 = vector.broadcast %54 : vector<4x8x1xf32> to vector<4x8x4xf32>
    %56 = arith.mulf %51, %55 : vector<4x8x4xf32>
    %57 = arith.truncf %56 : vector<4x8x4xf32> to vector<4x8x4xbf16>
    "tpu.trace_start"() <{level = 10 : i32, message = "hli,hid->hld"}> : () -> ()
    %cst_30 = arith.constant dense<0.000000e+00> : vector<4x8x8xf32>
    %58 = tpu.matmul %57, %43, %cst_30 {dimension_numbers = #tpu.dot_dimension_numbers<[2], [1], [1], [2], [0, 0, 0, 1, 1, 2], [0], [0]>} : vector<4x8x4xbf16>, vector<4x4x8xbf16>, vector<4x8x8xf32> -> vector<4x8x8xf32>
    "tpu.trace_stop"() : () -> ()
    %59 = tpu.transpose %58, [1, 0, 2] : vector<4x8x8xf32> -> vector<8x4x8xf32>
    %60 = vector.shape_cast %59 : vector<8x4x8xf32> to vector<8x32xf32>
    %61 = arith.truncf %60 : vector<8x32xf32> to vector<8x32xbf16>
    %c0_31 = arith.constant 0 : index
    %c0_32 = arith.constant 0 : index
    %62 = vector.load %arg7[%c0_31, %c0_32] : memref<32x32xbf16, #tpu.memory_space<vmem>>, vector<32x32xbf16>
    %cst_33 = arith.constant dense<0.000000e+00> : vector<8x32xf32>
    %63 = tpu.matmul %61, %62, %cst_33 {dimension_numbers = #tpu.dot_dimension_numbers<[1], [0], [0], [1], [0, 0, 1, 1], [], []>} : vector<8x32xbf16>, vector<32x32xbf16>, vector<8x32xf32> -> vector<8x32xf32>
    %64 = vector.shape_cast %13 : vector<32xf32> to vector<1x32xf32>
    %65 = vector.broadcast %64 : vector<1x32xf32> to vector<8x32xf32>
    %66 = arith.addf %63, %65 : vector<8x32xf32>
    %67 = arith.addf %1, %66 : vector<8x32xf32>
    %cst_34 = arith.constant dense<0.000000e+00> : vector<8xf32>
    %68 = vector.multi_reduction <add>, %67, %cst_34 [1] : vector<8x32xf32> to vector<8xf32>
    %69 = vector.shape_cast %68 : vector<8xf32> to vector<8x1xf32>
    %cst_35 = arith.constant 3.200000e+01 : f32
    %70 = vector.broadcast %cst_35 : f32 to vector<8x1xf32>
    %71 = arith.divf %69, %70 : vector<8x1xf32>
    %72 = vector.broadcast %71 : vector<8x1xf32> to vector<8x32xf32>
    %73 = arith.subf %67, %72 : vector<8x32xf32>
    %74 = arith.mulf %73, %73 : vector<8x32xf32>
    %cst_36 = arith.constant dense<0.000000e+00> : vector<8xf32>
    %75 = vector.multi_reduction <add>, %74, %cst_36 [1] : vector<8x32xf32> to vector<8xf32>
    %76 = vector.shape_cast %75 : vector<8xf32> to vector<8x1xf32>
    %cst_37 = arith.constant 3.200000e+01 : f32
    %77 = vector.broadcast %cst_37 : f32 to vector<8x1xf32>
    %78 = arith.divf %76, %77 : vector<8x1xf32>
    %cst_38 = arith.constant 9.99999974E-6 : f32
    %79 = vector.broadcast %cst_38 : f32 to vector<8x1xf32>
    %80 = arith.addf %78, %79 : vector<8x1xf32>
    %81 = math.rsqrt %80 : vector<8x1xf32>
    %82 = vector.broadcast %81 : vector<8x1xf32> to vector<8x32xf32>
    %83 = arith.mulf %73, %82 : vector<8x32xf32>
    %84 = vector.shape_cast %15 : vector<32xf32> to vector<1x32xf32>
    %85 = vector.broadcast %84 : vector<1x32xf32> to vector<8x32xf32>
    %86 = arith.mulf %83, %85 : vector<8x32xf32>
    %87 = vector.shape_cast %17 : vector<32xf32> to vector<1x32xf32>
    %88 = vector.broadcast %87 : vector<1x32xf32> to vector<8x32xf32>
    %89 = arith.addf %86, %88 : vector<8x32xf32>
    %c0_39 = arith.constant 0 : index
    %c0_40 = arith.constant 0 : index
    %c0_41 = arith.constant 0 : index
    %90 = vector.load %arg14[%c0_39, %c0_40, %c0_41] : memref<1x8x32xf32, #tpu.memory_space<vmem>>, vector<1x8x32xf32>
    %91 = vector.shape_cast %90 : vector<1x8x32xf32> to vector<8x32xf32>
    %92 = vector.shape_cast %89 : vector<8x32xf32> to vector<1x8x32xf32>
    tpu.vector_store %arg14[%c0_39, %c0_40, %c0_41], %92 {strides = array<i32>} : memref<1x8x32xf32, #tpu.memory_space<vmem>>, vector<1x8x32xf32>,
    return
  }
  func.func @transform_0(%arg0: i32, %arg1: i32) -> (i32, i32, i32) {
    %c0_i32 = arith.constant 0 : i32
    %c0_i32_0 = arith.constant 0 : i32
    return %arg0, %arg1, %c0_i32 : i32, i32, i32
  }
  func.func @transform_1(%arg0: i32, %arg1: i32) -> (i32, i32, i32) {
    %c0_i32 = arith.constant 0 : i32
    %c0_i32_0 = arith.constant 0 : i32
    %c0_i32_1 = arith.constant 0 : i32
    return %arg0, %c0_i32, %c0_i32_0 : i32, i32, i32
  }
  func.func @transform_2(%arg0: i32, %arg1: i32) -> (i32, i32) {
    %c0_i32 = arith.constant 0 : i32
    %c0_i32_0 = arith.constant 0 : i32
    %c0_i32_1 = arith.constant 0 : i32
    return %c0_i32, %c0_i32_0 : i32, i32
  }
  func.func @transform_3(%arg0: i32, %arg1: i32) -> (i32, i32) {
    %c0_i32 = arith.constant 0 : i32
    %c0_i32_0 = arith.constant 0 : i32
    %c0_i32_1 = arith.constant 0 : i32
    return %c0_i32, %c0_i32_0 : i32, i32
  }
  func.func @transform_4(%arg0: i32, %arg1: i32) -> (i32, i32) {
    %c0_i32 = arith.constant 0 : i32
    %c0_i32_0 = arith.constant 0 : i32
    %c0_i32_1 = arith.constant 0 : i32
    return %c0_i32, %c0_i32_0 : i32, i32
  }
  func.func @transform_5(%arg0: i32, %arg1: i32) -> (i32, i32) {
    %c0_i32 = arith.constant 0 : i32
    %c0_i32_0 = arith.constant 0 : i32
    %c0_i32_1 = arith.constant 0 : i32
    return %c0_i32, %c0_i32_0 : i32, i32
  }
  func.func @transform_6(%arg0: i32, %arg1: i32) -> (i32, i32) {
    %c0_i32 = arith.constant 0 : i32
    %c0_i32_0 = arith.constant 0 : i32
    %c0_i32_1 = arith.constant 0 : i32
    return %c0_i32, %c0_i32_0 : i32, i32
  }
  func.func @transform_7(%arg0: i32, %arg1: i32) -> (i32, i32) {
    %c0_i32 = arith.constant 0 : i32
    %c0_i32_0 = arith.constant 0 : i32
    %c0_i32_1 = arith.constant 0 : i32
    return %c0_i32, %c0_i32_0 : i32, i32
  }
  func.func @transform_8(%arg0: i32, %arg1: i32) -> (i32, i32) {
    %c0_i32 = arith.constant 0 : i32
    %c0_i32_0 = arith.constant 0 : i32
    %c0_i32_1 = arith.constant 0 : i32
    return %c0_i32, %c0_i32_0 : i32, i32
  }
  func.func @transform_9(%arg0: i32, %arg1: i32) -> (i32, i32) {
    %c0_i32 = arith.constant 0 : i32
    %c0_i32_0 = arith.constant 0 : i32
    %c0_i32_1 = arith.constant 0 : i32
    return %c0_i32, %c0_i32_0 : i32, i32
  }
  func.func @transform_10(%arg0: i32, %arg1: i32) -> (i32, i32) {
    %c0_i32 = arith.constant 0 : i32
    %c0_i32_0 = arith.constant 0 : i32
    %c0_i32_1 = arith.constant 0 : i32
    return %c0_i32, %c0_i32_0 : i32, i32
  }
  func.func @transform_11(%arg0: i32, %arg1: i32) -> (i32, i32) {
    %c0_i32 = arith.constant 0 : i32
    %c0_i32_0 = arith.constant 0 : i32
    %c0_i32_1 = arith.constant 0 : i32
    return %c0_i32, %c0_i32_0 : i32, i32
  }
  func.func @transform_12(%arg0: i32, %arg1: i32) -> (i32, i32, i32) {
    %c0_i32 = arith.constant 0 : i32
    %c0_i32_0 = arith.constant 0 : i32
    return %arg0, %arg1, %c0_i32 : i32, i32, i32
  }
}

</mosaic_0001>

<llo_original>
// kernel: tpu_custom_call.1
$region0: #{tpu_custom_call.1}
  #allocation0 [shape = 'u32[]', space=smem, size = 0x4, offset = 0x4, fixed_abs, tag = 'smem constant byte address 0x4 - core index']
  #allocation1 [shape = 'u32[72,128]{1,0:T(1,128)}', space=vmem, size = 0x9000, scoped, tag = 'internal scratch']
  %s0 = inlined_call_operand.hbm [shape: f32[2,8,32], index: 0, kind: input, shape index: {}]
  %s1 = inlined_call_operand.hbm [shape: f32[2,4,32], index: 1, kind: input, shape index: {}]
  %s2 = inlined_call_operand.hbm [shape: bf16[32,32], index: 2, kind: input, shape index: {}]
  %s3 = inlined_call_operand.hbm [shape: bf16[32,32], index: 3, kind: input, shape index: {}]
  %s4 = inlined_call_operand.hbm [shape: bf16[32,32], index: 4, kind: input, shape index: {}]
  %s5 = inlined_call_operand.hbm [shape: bf16[32,32], index: 5, kind: input, shape index: {}]
  %s6 = inlined_call_operand.vmem [shape: f32[1,32], index: 6, kind: input, shape index: {}]
  %s7 = inlined_call_operand.vmem [shape: f32[1,32], index: 7, kind: input, shape index: {}]
  %s8 = inlined_call_operand.vmem [shape: f32[1,32], index: 8, kind: input, shape index: {}]
  %s9 = inlined_call_operand.vmem [shape: f32[1,32], index: 9, kind: input, shape index: {}]
  %s10 = inlined_call_operand.vmem [shape: f32[1,32], index: 10, kind: input, shape index: {}]
  %s11 = inlined_call_operand.vmem [shape: f32[1,32], index: 11, kind: input, shape index: {}]
  %s12 = inlined_call_operand.hbm [shape: f32[2,8,32], index: 12, kind: output, shape index: {}]
  %s13 = sld [smem:[#allocation0]]
  $region105: #{tpu_custom_call.1} parent=0
    _
  %s15 = ssub.s32 1, %s13
  %s16 = scalar_select 0, %s15, %s13
  $region1: #{tpu_custom_call.1} parent=0
    #allocation2 [shape = 'u8[8192]{0}', space=vmem, size = 0x2000, scoped, tag = 'input window, operand 0']
    #allocation3 [shape = 's32[2]{0}', space=sflag, size = 0x8, scoped, tag = 'scoped memory for tpu_custom_call.1']
    #allocation4 [shape = 's32[2]{0}', space=sflag, size = 0x8, scoped, tag = 'scoped memory for tpu_custom_call.1']
    #allocation5 [shape = 'u8[4096]{0}', space=vmem, size = 0x1000, scoped, tag = 'input window, operand 1']
    #allocation6 [shape = 's32[2]{0}', space=sflag, size = 0x8, scoped, tag = 'scoped memory for tpu_custom_call.1']
    #allocation7 [shape = 'u8[8192]{0}', space=vmem, size = 0x2000, scoped, tag = 'input window, operand 2, single buffered']
    #allocation8 [shape = 'u8[8192]{0}', space=vmem, size = 0x2000, scoped, tag = 'input window, operand 3, single buffered']
    #allocation9 [shape = 's32[1]{0}', space=sflag, size = 0x4, scoped, tag = 'scoped memory for tpu_custom_call.1']
    #allocation10 [shape = 'u8[8192]{0}', space=vmem, size = 0x2000, scoped, tag = 'input window, operand 4, single buffered']
    #allocation11 [shape = 'u8[8192]{0}', space=vmem, size = 0x2000, scoped, tag = 'input window, operand 5, single buffered']
    #allocation12 [shape = 's32[1]{0}', space=sflag, size = 0x4, scoped, tag = 'scoped memory for tpu_custom_call.1']
    #allocation13 [shape = 'u8[8192]{0}', space=vmem, size = 0x2000, scoped, tag = 'output window, operand 0']
    %17 = vsyncpa [#allocation3], 0
    %s18 = scalar_lea.sflag [#allocation3], 1
    %19 = vsyncpa %s18, 0
    %20 = vsyncpa [#allocation6], 0
    %s21 = scalar_lea.sflag [#allocation6], 1
    %22 = vsyncpa %s21, 0
    %23 = vsyncpa [#allocation9], 0
    %24 = vsyncpa [#allocation12], 0
    %25 = vsyncpa [#allocation4], 0
    %s26 = scalar_lea.sflag [#allocation4], 1
    %27 = vsyncpa %s26, 0
    loop: start=0, step=1, limit=4
    $region2: #{tpu_custom_call.1} parent=1 // loop_pre_header
      _
    $region3: #{tpu_custom_call.1} parent=1 // loop_header
      %s29 = sphi 0, %s33
      %p30 = scmp.ge.s32.totalorder %s29, 4
      %s36 = sphi 0, %s48
      %s37 = sphi 0, %s44
      %s38 = sphi 0, %s36
      %s39 = sphi 0, %s37
      %s40 = sphi 0, %s38
      %s41 = sphi 0, %s39
      %s53 = sphi 0, %s55
      %s56 = sphi 0, %s53
      %s57 = sphi 0, %s56
      %s73 = sphi 0, %s57
      %s79 = sphi 0, %s81
      %s82 = sphi 0, %s79
      %s83 = sphi 0, %s82
      %s99 = sphi 0, %s83
      %s103 = sphi 0, %s103
      %s105 = sphi 0, %s103
      %s106 = sphi 0, %s105
      %s120 = sphi 0, %s106
      %s124 = sphi 0, %s124
      %s126 = sphi 0, %s124
      %s127 = sphi 0, %s126
      %s141 = sphi 0, %s127
      %s145 = sphi 0, %s145
      %s147 = sphi 0, %s145
      %s148 = sphi 0, %s147
      %s162 = sphi 0, %s148
      %s166 = sphi 0, %s166
      %s168 = sphi 0, %s166
      %s169 = sphi 0, %s168
      %s183 = sphi 0, %s169
      %s187 = sphi 0, %s187
      %s189 = sphi 0, %s187
      %s190 = sphi 0, %s189
      %s204 = sphi 0, %s190
      %s208 = sphi 0, %s208
      %s210 = sphi 0, %s208
      %s211 = sphi 0, %s210
      %s225 = sphi 0, %s211
      %s229 = sphi 0, %s229
      %s231 = sphi 0, %s229
      %s232 = sphi 0, %s231
      %s246 = sphi 0, %s232
      %s250 = sphi 0, %s250
      %s252 = sphi 0, %s250
      %s253 = sphi 0, %s252
      %s267 = sphi 0, %s253
      %s271 = sphi 0, %s271
      %s273 = sphi 0, %s271
      %s274 = sphi 0, %s273
      %s288 = sphi 0, %s274
      %s292 = sphi 0, %s292
      %s294 = sphi 0, %s292
      %s295 = sphi 0, %s294
      %s309 = sphi 0, %s295
      %s317 = sphi 0, %s319
      %s320 = sphi 0, %s317
      %s321 = sphi 0, %s320
      %s337 = sphi 0, %s321
    $region4: #{tpu_custom_call.1} parent=1 // loop_header_branch
      %32 = sbr.rel (%p30) target = $region8
    $region5: #{tpu_custom_call.1} parent=1 // loop_body
      %s34 = ssub.s32 %s29, 1
      %s35 = ssub.s32 %s29, 2
      %s42 = sadd.s32 1, %s37
      %p43 = scmp.ge.s32.totalorder %s42, 1
      %s44 = scalar_select %p43, 0, %s42
      %s45 = sadd.s32 1, %s36
      %s46 = scalar_select %p43, %s45, %s36
      %p47 = scmp.ge.s32.totalorder %s46, 2
      %s48 = scalar_select %p47, 0, %s46
      %s49 = ssub.s32 %s36, %s48
      %s50 = ssub.s32 %s37, %s44
      %s51 = sor.u32 %s49, %s50
      %p52 = scmp.eq.s32.totalorder %s51, 0
      %s54 = sadd.s32 %s53, 1
      %s55 = scalar_select %p52, %s53, %s54
      %p58 = pneg %p52
      %p59 = scmp.eq.s32.totalorder %s29, 1
      %p60 = por %p58, %p59
      %p61 = scmp.ne.s32.totalorder %s53, %s56
      %p62 = scmp.eq.s32.totalorder %s29, 0
      %p63 = por %p61, %p62
      %p64 = scmp.ne.s32.totalorder %s53, %s56
      %p65 = scmp.eq.s32.totalorder %s34, 1
      %p66 = por %p64, %p65
      %p67 = scmp.ne.s32.totalorder %s56, %s57
      %p68 = scmp.eq.s32.totalorder %s34, 0
      %p69 = por %p67, %p68
      %p70 = scmp.ne.s32.totalorder %s56, %s57
      %p71 = scmp.eq.s32.totalorder %s35, 1
      %p72 = por %p70, %p71
      %p74 = scmp.ne.s32.totalorder %s57, %s73
      %p75 = scmp.eq.s32.totalorder %s35, 0
      %p76 = por %p74, %p75
      %s77 = ssub.s32 %s36, %s48
      %p78 = scmp.eq.s32.totalorder %s77, 0
      %s80 = sadd.s32 %s79, 1
      %s81 = scalar_select %p78, %s79, %s80
      %p84 = pneg %p78
      %p85 = scmp.eq.s32.totalorder %s29, 1
      %p86 = por %p84, %p85
      %p87 = scmp.ne.s32.totalorder %s79, %s82
      %p88 = scmp.eq.s32.totalorder %s29, 0
      %p89 = por %p87, %p88
      %p90 = scmp.ne.s32.totalorder %s79, %s82
      %p91 = scmp.eq.s32.totalorder %s34, 1
      %p92 = por %p90, %p91
      %p93 = scmp.ne.s32.totalorder %s82, %s83
      %p94 = scmp.eq.s32.totalorder %s34, 0
      %p95 = por %p93, %p94
      %p96 = scmp.ne.s32.totalorder %s82, %s83
      %p97 = scmp.eq.s32.totalorder %s35, 1
      %p98 = por %p96, %p97
      %p100 = scmp.ne.s32.totalorder %s83, %s99
      %p101 = scmp.eq.s32.totalorder %s35, 0
      %p102 = por %p100, %p101
      %s104 = sadd.s32 %s103, 1
      %p107 = scmp.eq.s32.totalorder %s29, 1
      %p108 = scmp.ne.s32.totalorder %s103, %s105
      %p109 = scmp.eq.s32.totalorder %s29, 0
      %p110 = por %p108, %p109
      %p111 = scmp.ne.s32.totalorder %s103, %s105
      %p112 = scmp.eq.s32.totalorder %s34, 1
      %p113 = por %p111, %p112
      %p114 = scmp.ne.s32.totalorder %s105, %s106
      %p115 = scmp.eq.s32.totalorder %s34, 0
      %p116 = por %p114, %p115
      %p117 = scmp.ne.s32.totalorder %s105, %s106
      %p118 = scmp.eq.s32.totalorder %s35, 1
      %p119 = por %p117, %p118
      %p121 = scmp.ne.s32.totalorder %s106, %s120
      %p122 = scmp.eq.s32.totalorder %s35, 0
      %p123 = por %p121, %p122
      %s125 = sadd.s32 %s124, 1
      %p128 = scmp.eq.s32.totalorder %s29, 1
      %p129 = scmp.ne.s32.totalorder %s124, %s126
      %p130 = scmp.eq.s32.totalorder %s29, 0
      %p131 = por %p129, %p130
      %p132 = scmp.ne.s32.totalorder %s124, %s126
      %p133 = scmp.eq.s32.totalorder %s34, 1
      %p134 = por %p132, %p133
      %p135 = scmp.ne.s32.totalorder %s126, %s127
      %p136 = scmp.eq.s32.totalorder %s34, 0
      %p137 = por %p135, %p136
      %p138 = scmp.ne.s32.totalorder %s126, %s127
      %p139 = scmp.eq.s32.totalorder %s35, 1
      %p140 = por %p138, %p139
      %p142 = scmp.ne.s32.totalorder %s127, %s141
      %p143 = scmp.eq.s32.totalorder %s35, 0
      %p144 = por %p142, %p143
      %s146 = sadd.s32 %s145, 1
      %p149 = scmp.eq.s32.totalorder %s29, 1
      %p150 = scmp.ne.s32.totalorder %s145, %s147
      %p151 = scmp.eq.s32.totalorder %s29, 0
      %p152 = por %p150, %p151
      %p153 = scmp.ne.s32.totalorder %s145, %s147
      %p154 = scmp.eq.s32.totalorder %s34, 1
      %p155 = por %p153, %p154
      %p156 = scmp.ne.s32.totalorder %s147, %s148
      %p157 = scmp.eq.s32.totalorder %s34, 0
      %p158 = por %p156, %p157
      %p159 = scmp.ne.s32.totalorder %s147, %s148
      %p160 = scmp.eq.s32.totalorder %s35, 1
      %p161 = por %p159, %p160
      %p163 = scmp.ne.s32.totalorder %s148, %s162
      %p164 = scmp.eq.s32.totalorder %s35, 0
      %p165 = por %p163, %p164
      %s167 = sadd.s32 %s166, 1
      %p170 = scmp.eq.s32.totalorder %s29, 1
      %p171 = scmp.ne.s32.totalorder %s166, %s168
      %p172 = scmp.eq.s32.totalorder %s29, 0
      %p173 = por %p171, %p172
      %p174 = scmp.ne.s32.totalorder %s166, %s168
      %p175 = scmp.eq.s32.totalorder %s34, 1
      %p176 = por %p174, %p175
      %p177 = scmp.ne.s32.totalorder %s168, %s169
      %p178 = scmp.eq.s32.totalorder %s34, 0
      %p179 = por %p177, %p178
      %p180 = scmp.ne.s32.totalorder %s168, %s169
      %p181 = scmp.eq.s32.totalorder %s35, 1
      %p182 = por %p180, %p181
      %p184 = scmp.ne.s32.totalorder %s169, %s183
      %p185 = scmp.eq.s32.totalorder %s35, 0
      %p186 = por %p184, %p185
      %s188 = sadd.s32 %s187, 1
      %p191 = scmp.eq.s32.totalorder %s29, 1
      %p192 = scmp.ne.s32.totalorder %s187, %s189
      %p193 = scmp.eq.s32.totalorder %s29, 0
      %p194 = por %p192, %p193
      %p195 = scmp.ne.s32.totalorder %s187, %s189
      %p196 = scmp.eq.s32.totalorder %s34, 1
      %p197 = por %p195, %p196
      %p198 = scmp.ne.s32.totalorder %s189, %s190
      %p199 = scmp.eq.s32.totalorder %s34, 0
      %p200 = por %p198, %p199
      %p201 = scmp.ne.s32.totalorder %s189, %s190
      %p202 = scmp.eq.s32.totalorder %s35, 1
      %p203 = por %p201, %p202
      %p205 = scmp.ne.s32.totalorder %s190, %s204
      %p206 = scmp.eq.s32.totalorder %s35, 0
      %p207 = por %p205, %p206
      %s209 = sadd.s32 %s208, 1
      %p212 = scmp.eq.s32.totalorder %s29, 1
      %p213 = scmp.ne.s32.totalorder %s208, %s210
      %p214 = scmp.eq.s32.totalorder %s29, 0
      %p215 = por %p213, %p214
      %p216 = scmp.ne.s32.totalorder %s208, %s210
      %p217 = scmp.eq.s32.totalorder %s34, 1
      %p218 = por %p216, %p217
      %p219 = scmp.ne.s32.totalorder %s210, %s211
      %p220 = scmp.eq.s32.totalorder %s34, 0
      %p221 = por %p219, %p220
      %p222 = scmp.ne.s32.totalorder %s210, %s211
      %p223 = scmp.eq.s32.totalorder %s35, 1
      %p224 = por %p222, %p223
      %p226 = scmp.ne.s32.totalorder %s211, %s225
      %p227 = scmp.eq.s32.totalorder %s35, 0
      %p228 = por %p226, %p227
      %s230 = sadd.s32 %s229, 1
      %p233 = scmp.eq.s32.totalorder %s29, 1
      %p234 = scmp.ne.s32.totalorder %s229, %s231
      %p235 = scmp.eq.s32.totalorder %s29, 0
      %p236 = por %p234, %p235
      %p237 = scmp.ne.s32.totalorder %s229, %s231
      %p238 = scmp.eq.s32.totalorder %s34, 1
      %p239 = por %p237, %p238
      %p240 = scmp.ne.s32.totalorder %s231, %s232
      %p241 = scmp.eq.s32.totalorder %s34, 0
      %p242 = por %p240, %p241
      %p243 = scmp.ne.s32.totalorder %s231, %s232
      %p244 = scmp.eq.s32.totalorder %s35, 1
      %p245 = por %p243, %p244
      %p247 = scmp.ne.s32.totalorder %s232, %s246
      %p248 = scmp.eq.s32.totalorder %s35, 0
      %p249 = por %p247, %p248
      %s251 = sadd.s32 %s250, 1
      %p254 = scmp.eq.s32.totalorder %s29, 1
      %p255 = scmp.ne.s32.totalorder %s250, %s252
      %p256 = scmp.eq.s32.totalorder %s29, 0
      %p257 = por %p255, %p256
      %p258 = scmp.ne.s32.totalorder %s250, %s252
      %p259 = scmp.eq.s32.totalorder %s34, 1
      %p260 = por %p258, %p259
      %p261 = scmp.ne.s32.totalorder %s252, %s253
      %p262 = scmp.eq.s32.totalorder %s34, 0
      %p263 = por %p261, %p262
      %p264 = scmp.ne.s32.totalorder %s252, %s253
      %p265 = scmp.eq.s32.totalorder %s35, 1
      %p266 = por %p264, %p265
      %p268 = scmp.ne.s32.totalorder %s253, %s267
      %p269 = scmp.eq.s32.totalorder %s35, 0
      %p270 = por %p268, %p269
      %s272 = sadd.s32 %s271, 1
      %p275 = scmp.eq.s32.totalorder %s29, 1
      %p276 = scmp.ne.s32.totalorder %s271, %s273
      %p277 = scmp.eq.s32.totalorder %s29, 0
      %p278 = por %p276, %p277
      %p279 = scmp.ne.s32.totalorder %s271, %s273
      %p280 = scmp.eq.s32.totalorder %s34, 1
      %p281 = por %p279, %p280
      %p282 = scmp.ne.s32.totalorder %s273, %s274
      %p283 = scmp.eq.s32.totalorder %s34, 0
      %p284 = por %p282, %p283
      %p285 = scmp.ne.s32.totalorder %s273, %s274
      %p286 = scmp.eq.s32.totalorder %s35, 1
      %p287 = por %p285, %p286
      %p289 = scmp.ne.s32.totalorder %s274, %s288
      %p290 = scmp.eq.s32.totalorder %s35, 0
      %p291 = por %p289, %p290
      %s293 = sadd.s32 %s292, 1
      %p296 = scmp.eq.s32.totalorder %s29, 1
      %p297 = scmp.ne.s32.totalorder %s292, %s294
      %p298 = scmp.eq.s32.totalorder %s29, 0
      %p299 = por %p297, %p298
      %p300 = scmp.ne.s32.totalorder %s292, %s294
      %p301 = scmp.eq.s32.totalorder %s34, 1
      %p302 = por %p300, %p301
      %p303 = scmp.ne.s32.totalorder %s294, %s295
      %p304 = scmp.eq.s32.totalorder %s34, 0
      %p305 = por %p303, %p304
      %p306 = scmp.ne.s32.totalorder %s294, %s295
      %p307 = scmp.eq.s32.totalorder %s35, 1
      %p308 = por %p306, %p307
      %p310 = scmp.ne.s32.totalorder %s295, %s309
      %p311 = scmp.eq.s32.totalorder %s35, 0
      %p312 = por %p310, %p311
      %s313 = ssub.s32 %s36, %s48
      %s314 = ssub.s32 %s37, %s44
      %s315 = sor.u32 %s313, %s314
      %p316 = scmp.eq.s32.totalorder %s315, 0
      %s318 = sadd.s32 %s317, 1
      %s319 = scalar_select %p316, %s317, %s318
      %p322 = pneg %p316
      %p323 = scmp.eq.s32.totalorder %s29, 1
      %p324 = por %p322, %p323
      %p325 = scmp.ne.s32.totalorder %s317, %s320
      %p326 = scmp.eq.s32.totalorder %s29, 0
      %p327 = por %p325, %p326
      %p328 = scmp.ne.s32.totalorder %s317, %s320
      %p329 = scmp.eq.s32.totalorder %s34, 1
      %p330 = por %p328, %p329
      %p331 = scmp.ne.s32.totalorder %s320, %s321
      %p332 = scmp.eq.s32.totalorder %s34, 0
      %p333 = por %p331, %p332
      %p334 = scmp.ne.s32.totalorder %s320, %s321
      %p335 = scmp.eq.s32.totalorder %s35, 1
      %p336 = por %p334, %p335
      %p338 = scmp.ne.s32.totalorder %s321, %s337
      %p339 = scmp.eq.s32.totalorder %s35, 0
      %p340 = por %p338, %p339
      %p341 = scmp.le.s32.totalorder 1, %s29
      %p342 = scmp.lt.s32.totalorder %s29, 3
      %p343 = pnand %p341, %p342
      %p344 = pneg %p343
      // Predicated region
      $region9: #{tpu_custom_call.1} parent=5 // pred_check
        _
      $region10: #{tpu_custom_call.1} parent=5 // pred_check_branch
        %346 = sbr.rel (%p343) target = $region12
      $region11: #{tpu_custom_call.1} parent=5 // pred_region
        %s347 = ssub.s32 %s29, 1
        // Predicated region
        $region13: #{tpu_custom_call.1} parent=11 // pred_check
          %p348 = pneg %p116
        $region14: #{tpu_custom_call.1} parent=11 // pred_check_branch
          %350 = sbr.rel (%p348) target = $region16
        $region15: #{tpu_custom_call.1} parent=11 // pred_region
          %352 = vsyncadd [#allocation6], 0
          %s353 = sshll.u32 %s2, 4
          %s354 = int_to_ptr.hbm [resolvable:$true] %s353
          %s355 = sshll.u32 [#allocation7], 4
          %s356 = int_to_ptr.vmem [resolvable:$true] %s355
          %361 = dma.hbm_to_vmem [thread:$0]  %s354, 256, %s356, [#allocation6], 64, 64, 4
        $region16: #{tpu_custom_call.1} parent=11 // pred_fallthru
          _
        // Predicated region
        $region17: #{tpu_custom_call.1} parent=11 // pred_check
          %p362 = pneg %p137
        $region18: #{tpu_custom_call.1} parent=11 // pred_check_branch
          %364 = sbr.rel (%p362) target = $region20
        $region19: #{tpu_custom_call.1} parent=11 // pred_region
          %366 = vsyncadd [#allocation9], 0
          %s367 = sshll.u32 %s3, 4
          %s368 = int_to_ptr.hbm [resolvable:$true] %s367
          %s369 = sshll.u32 [#allocation8], 4
          %s370 = int_to_ptr.vmem [resolvable:$true] %s369
          %375 = dma.hbm_to_vmem [thread:$0]  %s368, 256, %s370, [#allocation9], 64, 64, 4
        $region20: #{tpu_custom_call.1} parent=11 // pred_fallthru
          _
        // Predicated region
        $region21: #{tpu_custom_call.1} parent=11 // pred_check
          %p376 = pneg %p158
        $region22: #{tpu_custom_call.1} parent=11 // pred_check_branch
          %378 = sbr.rel (%p376) target = $region24
        $region23: #{tpu_custom_call.1} parent=11 // pred_region
          %380 = vsyncadd [#allocation9], 0
          %s381 = sshll.u32 %s4, 4
          %s382 = int_to_ptr.hbm [resolvable:$true] %s381
          %s383 = sshll.u32 [#allocation10], 4
          %s384 = int_to_ptr.vmem [resolvable:$true] %s383
          %389 = dma.hbm_to_vmem [thread:$0]  %s382, 256, %s384, [#allocation9], 64, 64, 4
        $region24: #{tpu_custom_call.1} parent=11 // pred_fallthru
          _
        // Predicated region
        $region25: #{tpu_custom_call.1} parent=11 // pred_check
          %p390 = pneg %p179
        $region26: #{tpu_custom_call.1} parent=11 // pred_check_branch
          %392 = sbr.rel (%p390) target = $region28
        $region27: #{tpu_custom_call.1} parent=11 // pred_region
          %394 = vsyncadd [#allocation12], 0
          %s395 = sshll.u32 %s5, 4
          %s396 = int_to_ptr.hbm [resolvable:$true] %s395
          %s397 = sshll.u32 [#allocation11], 4
          %s398 = int_to_ptr.vmem [resolvable:$true] %s397
          %403 = dma.hbm_to_vmem [thread:$0]  %s396, 256, %s398, [#allocation12], 64, 64, 4
        $region28: #{tpu_custom_call.1} parent=11 // pred_fallthru
          _
        // Predicated region
        $region29: #{tpu_custom_call.1} parent=11 // pred_check
          %p404 = pneg %p200
        $region30: #{tpu_custom_call.1} parent=11 // pred_check_branch
          %406 = sbr.rel (%p404) target = $region32
        $region31: #{tpu_custom_call.1} parent=11 // pred_region
          _
        $region32: #{tpu_custom_call.1} parent=11 // pred_fallthru
          _
        // Predicated region
        $region33: #{tpu_custom_call.1} parent=11 // pred_check
          %p407 = pneg %p221
        $region34: #{tpu_custom_call.1} parent=11 // pred_check_branch
          %409 = sbr.rel (%p407) target = $region36
        $region35: #{tpu_custom_call.1} parent=11 // pred_region
          _
        $region36: #{tpu_custom_call.1} parent=11 // pred_fallthru
          _
        // Predicated region
        $region37: #{tpu_custom_call.1} parent=11 // pred_check
          %p410 = pneg %p242
        $region38: #{tpu_custom_call.1} parent=11 // pred_check_branch
          %412 = sbr.rel (%p410) target = $region40
        $region39: #{tpu_custom_call.1} parent=11 // pred_region
          _
        $region40: #{tpu_custom_call.1} parent=11 // pred_fallthru
          _
        // Predicated region
        $region41: #{tpu_custom_call.1} parent=11 // pred_check
          %p413 = pneg %p263
        $region42: #{tpu_custom_call.1} parent=11 // pred_check_branch
          %415 = sbr.rel (%p413) target = $region44
        $region43: #{tpu_custom_call.1} parent=11 // pred_region
          _
        $region44: #{tpu_custom_call.1} parent=11 // pred_fallthru
          _
        // Predicated region
        $region45: #{tpu_custom_call.1} parent=11 // pred_check
          %p416 = pneg %p284
        $region46: #{tpu_custom_call.1} parent=11 // pred_check_branch
          %418 = sbr.rel (%p416) target = $region48
        $region47: #{tpu_custom_call.1} parent=11 // pred_region
          _
        $region48: #{tpu_custom_call.1} parent=11 // pred_fallthru
          _
        // Predicated region
        $region49: #{tpu_custom_call.1} parent=11 // pred_check
          %p419 = pneg %p305
        $region50: #{tpu_custom_call.1} parent=11 // pred_check_branch
          %421 = sbr.rel (%p419) target = $region52
        $region51: #{tpu_custom_call.1} parent=11 // pred_region
          _
        $region52: #{tpu_custom_call.1} parent=11 // pred_fallthru
          _
      $region12: #{tpu_custom_call.1} parent=5 // pred_fallthru
        _
      %p422 = scmp.lt.s32.totalorder %s29, 2
      // Predicated region
      $region53: #{tpu_custom_call.1} parent=5 // pred_check
        %p423 = pneg %p422
      $region54: #{tpu_custom_call.1} parent=5 // pred_check_branch
        %425 = sbr.rel (%p423) target = $region56
      $region55: #{tpu_custom_call.1} parent=5 // pred_region
        // Predicated region
        $region57: #{tpu_custom_call.1} parent=55 // pred_check
          %p426 = pneg %p63
        $region58: #{tpu_custom_call.1} parent=55 // pred_check_branch
          %428 = sbr.rel (%p426) target = $region60
        $region59: #{tpu_custom_call.1} parent=55 // pred_region
          %s429 = sand.u32 %s53, 1
          %s430 = scalar_lea.sflag [#allocation3], %s429
          %s431 = sand.u32 %s53, 1
          %s432 = smul.addr %s431, 8
          %s433 = scalar_lea.vmem [#allocation2], %s432
          %435 = vsyncadd %s430, 0
          %s436 = sadd.s32 %s37, %s36
          %s437 = smul.addr %s436, 8
          %s438 = scalar_lea.hbm %s0, %s437
          %s440 = sshll.u32 %s438, 4
          %s441 = int_to_ptr.hbm [resolvable:$true] %s440
          %s442 = sshll.u32 %s433, 4
          %s443 = int_to_ptr.vmem [resolvable:$true] %s442
          %445 = dma.hbm_to_vmem [thread:$0]  %s441, 128, %s443, %s430
        $region60: #{tpu_custom_call.1} parent=55 // pred_fallthru
          _
        // Predicated region
        $region61: #{tpu_custom_call.1} parent=55 // pred_check
          %p446 = pneg %p89
        $region62: #{tpu_custom_call.1} parent=55 // pred_check_branch
          %448 = sbr.rel (%p446) target = $region64
        $region63: #{tpu_custom_call.1} parent=55 // pred_region
          %s449 = sand.u32 %s29, 1
          %s450 = scalar_lea.sflag [#allocation6], %s449
          %s451 = sand.u32 %s79, 1
          %s452 = smul.addr %s451, 4
          %s453 = scalar_lea.vmem [#allocation5], %s452
          %455 = vsyncadd %s450, 0
          %s456 = smul.addr %s36, 4
          %s457 = scalar_lea.hbm %s1, %s456
          %s459 = sshll.u32 %s457, 4
          %s460 = int_to_ptr.hbm [resolvable:$true] %s459
          %s461 = sshll.u32 %s453, 4
          %s462 = int_to_ptr.vmem [resolvable:$true] %s461
          %464 = dma.hbm_to_vmem [thread:$0]  %s460, 64, %s462, %s450
        $region64: #{tpu_custom_call.1} parent=55 // pred_fallthru
          _
      $region56: #{tpu_custom_call.1} parent=5 // pred_fallthru
        _
      %p465 = scmp.le.s32.totalorder 1, %s29
      %p466 = scmp.lt.s32.totalorder %s29, 3
      %p467 = pnand %p465, %p466
      %p468 = pneg %p467
      // Predicated region
      $region65: #{tpu_custom_call.1} parent=5 // pred_check
        _
      $region66: #{tpu_custom_call.1} parent=5 // pred_check_branch
        %470 = sbr.rel (%p467) target = $region68
      $region67: #{tpu_custom_call.1} parent=5 // pred_region
        %s471 = ssub.s32 %s29, 1
        %s472 = sand.u32 %s56, 1
        %s473 = scalar_lea.sflag [#allocation3], %s472
        %s474 = sand.u32 %s56, 1
        %s475 = smul.addr %s474, 8
        %s476 = scalar_lea.vmem [#allocation2], %s475
        // Predicated region
        $region69: #{tpu_custom_call.1} parent=67 // pred_check
          %p477 = pneg %p69
        $region70: #{tpu_custom_call.1} parent=67 // pred_check_branch
          %479 = sbr.rel (%p477) target = $region72
        $region71: #{tpu_custom_call.1} parent=67 // pred_region
          %481 = dma.done %s473, 128
        $region72: #{tpu_custom_call.1} parent=67 // pred_fallthru
          _
        %s482 = sand.u32 %s34, 1
        %s483 = scalar_lea.sflag [#allocation6], %s482
        %s484 = sand.u32 %s82, 1
        %s485 = smul.addr %s484, 4
        %s486 = scalar_lea.vmem [#allocation5], %s485
        // Predicated region
        $region73: #{tpu_custom_call.1} parent=67 // pred_check
          %p487 = pneg %p95
        $region74: #{tpu_custom_call.1} parent=67 // pred_check_branch
          %489 = sbr.rel (%p487) target = $region76
        $region75: #{tpu_custom_call.1} parent=67 // pred_region
          %491 = dma.done %s483, 64
        $region76: #{tpu_custom_call.1} parent=67 // pred_fallthru
          _
        // Predicated region
        $region77: #{tpu_custom_call.1} parent=67 // pred_check
          %p492 = pneg %p116
        $region78: #{tpu_custom_call.1} parent=67 // pred_check_branch
          %494 = sbr.rel (%p492) target = $region80
        $region79: #{tpu_custom_call.1} parent=67 // pred_region
          %496 = dma.done [#allocation6], 256
        $region80: #{tpu_custom_call.1} parent=67 // pred_fallthru
          _
        // Predicated region
        $region81: #{tpu_custom_call.1} parent=67 // pred_check
          %p497 = pneg %p137
        $region82: #{tpu_custom_call.1} parent=67 // pred_check_branch
          %499 = sbr.rel (%p497) target = $region84
        $region83: #{tpu_custom_call.1} parent=67 // pred_region
          %501 = dma.done [#allocation9], 256
        $region84: #{tpu_custom_call.1} parent=67 // pred_fallthru
          _
        // Predicated region
        $region85: #{tpu_custom_call.1} parent=67 // pred_check
          %p502 = pneg %p158
        $region86: #{tpu_custom_call.1} parent=67 // pred_check_branch
          %504 = sbr.rel (%p502) target = $region88
        $region87: #{tpu_custom_call.1} parent=67 // pred_region
          %506 = dma.done [#allocation9], 256
        $region88: #{tpu_custom_call.1} parent=67 // pred_fallthru
          _
        // Predicated region
        $region89: #{tpu_custom_call.1} parent=67 // pred_check
          %p507 = pneg %p179
        $region90: #{tpu_custom_call.1} parent=67 // pred_check_branch
          %509 = sbr.rel (%p507) target = $region92
        $region91: #{tpu_custom_call.1} parent=67 // pred_region
          %511 = dma.done [#allocation12], 256
        $region92: #{tpu_custom_call.1} parent=67 // pred_fallthru
          _
        %s512 = sand.u32 %s56, 1
        %s513 = scalar_lea.sflag [#allocation3], %s512
        %s514 = sand.u32 %s56, 1
        %s515 = smul.addr %s514, 8
        %s516 = scalar_lea.vmem [#allocation2], %s515
        %p517 = pneg %p69
        %p518 = pneg %p66
        %s519 = sand.u32 %s34, 1
        %s520 = scalar_lea.sflag [#allocation6], %s519
        %s521 = sand.u32 %s82, 1
        %s522 = smul.addr %s521, 4
        %s523 = scalar_lea.vmem [#allocation5], %s522
        %p524 = pneg %p95
        %p525 = pneg %p92
        %p526 = pneg %p116
        %p527 = pneg %p113
        %p528 = pneg %p137
        %p529 = pneg %p134
        %p530 = pneg %p158
        %p531 = pneg %p155
        %p532 = pneg %p179
        %p533 = pneg %p176
        %p534 = pneg %p200
        %p535 = pneg %p197
        %p536 = pneg %p221
        %p537 = pneg %p218
        %p538 = pneg %p242
        %p539 = pneg %p239
        %p540 = pneg %p263
        %p541 = pneg %p260
        %p542 = pneg %p284
        %p543 = pneg %p281
        %p544 = pneg %p305
        %p545 = pneg %p302
        %p546 = pneg %p333
        %p547 = pneg %p330
        %s548 = sand.u32 %s320, 1
        %s549 = scalar_lea.sflag [#allocation4], %s548
        %s550 = sand.u32 %s320, 1
        %s551 = smul.addr %s550, 8
        %s552 = scalar_lea.vmem [#allocation13], %s551
        %v554 = vld [vmem:[%s476] sm:$0xff]
        %v555 = vld [vmem:[%s486] sm:$0xf]
        %v556 = vld [vmem:[%s6] sm:$0x1]
        %v557 = vld [vmem:[%s7] sm:$0x1]
        %v558 = vld [vmem:[%s8] sm:$0x1]
        %v559 = vld [vmem:[%s9] sm:$0x1]
        %v560 = vld [vmem:[%s10] sm:$0x1]
        %v561 = vld [vmem:[%s11] sm:$0x1]
        %v562 = vpack.c.bf16 %v554, %v554
        %v563 = vpack.c.bf16 %v555, %v555
        %v564 = vld [vmem:[#allocation7] sm:$0xf]
        %v565 = vld [vmem:[#allocation7 + $0x4] sm:$0xf]
        %v566 = vld [vmem:[#allocation7 + $0x8] sm:$0xf]
        %v567 = vld [vmem:[#allocation7 + $0xc] sm:$0xf]
        %v569 = vperm.slane %v556, 0
        %v575 = vunpack.c.l.b16 %v564
        %v576 = vunpack.c.l.b16 %v565
        %v577 = vunpack.c.l.b16 %v566
        %v578 = vunpack.c.l.b16 %v567
        %v579 = vpack.c.b16 %v576, %v575
        %v580 = vpack.c.b16 %v578, %v577
        %vm583 = vcmask 261120
        %v585 = vsel %vm583, %v562, 0
        %587 = vmatpush.bf16.msra.mxu0 0
        %588 = vmatpush.bf16.msra.mxu0 0
        %589 = vmatpush.bf16.msra.mxu0 0
        %590 = vmatpush.bf16.msra.mxu0 0
        %591 = vmatpush.bf16.msra.mxu0 0
        %592 = vmatpush.bf16.msra.mxu0 0
        %593 = vmatpush.bf16.msra.mxu0 %v580
        %594 = vmatpush.bf16.msra.mxu0 %v579
        %595 = vmatmul.bf16.gmra.mxu0 %v585
        %v596 = vpop.f32.mrf.mxu0
        %v597 = vadd.f32 %v569, %v596
        %v598 = vpop.f32.mrf.mxu0
        %599 = vdwg.mxu0
        %v600 = vld [vmem:[#allocation8] sm:$0xf]
        %v601 = vld [vmem:[#allocation8 + $0x4] sm:$0xf]
        %v602 = vld [vmem:[#allocation8 + $0x8] sm:$0xf]
        %v603 = vld [vmem:[#allocation8 + $0xc] sm:$0xf]
        %v605 = vperm.slane %v557, 0
        %v611 = vunpack.c.l.b16 %v600
        %v612 = vunpack.c.l.b16 %v601
        %v613 = vunpack.c.l.b16 %v602
        %v614 = vunpack.c.l.b16 %v603
        %v615 = vpack.c.b16 %v612, %v611
        %v616 = vpack.c.b16 %v614, %v613
        %v620 = vsel %vm583, %v563, 0
        %622 = vmatpush.bf16.msra.mxu0 0
        %623 = vmatpush.bf16.msra.mxu0 0
        %624 = vmatpush.bf16.msra.mxu0 0
        %625 = vmatpush.bf16.msra.mxu0 0
        %626 = vmatpush.bf16.msra.mxu0 0
        %627 = vmatpush.bf16.msra.mxu0 0
        %628 = vmatpush.bf16.msra.mxu0 %v616
        %629 = vmatpush.bf16.msra.mxu0 %v615
        %630 = vmatmul.bf16.gmra.mxu0 %v620
        %v631 = vpop.f32.mrf.mxu0
        %v632 = vadd.f32 %v605, %v631
        %v633 = vpop.f32.mrf.mxu0
        %634 = vdwg.mxu0
        %v635 = vld [vmem:[#allocation10] sm:$0xf]
        %v636 = vld [vmem:[#allocation10 + $0x4] sm:$0xf]
        %v637 = vld [vmem:[#allocation10 + $0x8] sm:$0xf]
        %v638 = vld [vmem:[#allocation10 + $0xc] sm:$0xf]
        %v640 = vperm.slane %v558, 0
        %v646 = vunpack.c.l.b16 %v635
        %v647 = vunpack.c.l.b16 %v636
        %v648 = vunpack.c.l.b16 %v637
        %v649 = vunpack.c.l.b16 %v638
        %v650 = vpack.c.b16 %v647, %v646
        %v651 = vpack.c.b16 %v649, %v648
        %654 = vmatpush.bf16.msra.mxu0 0
        %655 = vmatpush.bf16.msra.mxu0 0
        %656 = vmatpush.bf16.msra.mxu0 0
        %657 = vmatpush.bf16.msra.mxu0 0
        %658 = vmatpush.bf16.msra.mxu0 0
        %659 = vmatpush.bf16.msra.mxu0 0
        %660 = vmatpush.bf16.msra.mxu0 %v651
        %661 = vmatpush.bf16.msra.mxu0 %v650
        %662 = vmatmul.bf16.gmra.mxu0 %v620
        %v663 = vpop.f32.mrf.mxu0
        %v664 = vadd.f32 %v640, %v663
        %v665 = vpop.f32.mrf.mxu0
        %666 = vdwg.mxu0
        %668 = vrot.lane.b32.xlu0 %v597, 120
        %v669 = vpop.permute.xlu0 %668
        %671 = vrot.lane.b32.xlu0 %v597, 112
        %v672 = vpop.permute.xlu0 %671
        %674 = vrot.lane.b32.xlu0 %v597, 104
        %v675 = vpop.permute.xlu0 %674
        %v677 = vrot.slane %v672, 4
        %vm678 = vcmask 1047556
        %v679 = vsel %vm678, %v677, %v597
        %v680 = vrot.slane %v597, 4
        %v681 = vsel %vm678, %v672, %v680
        %v683 = vunpack.c.l.s4 1983009808
        %v684 = vunpack.c.0.s8 %v683
        %v685 = vperm.slane %v679, %v684
        %v687 = vunpack.c.l.s4 1983009808
        %v688 = vunpack.c.0.s8 %v687
        %v689 = vperm.slane %v681, %v688
        %v690 = vrot.slane %v675, 4
        %v691 = vsel %vm678, %v690, %v669
        %v692 = vrot.slane %v669, 4
        %v693 = vsel %vm678, %v675, %v692
        %v695 = vunpack.c.l.s4 1983009808
        %v696 = vunpack.c.0.s8 %v695
        %v697 = vperm.slane %v691, %v696
        %v699 = vunpack.c.l.s4 1983009808
        %v700 = vunpack.c.0.s8 %v699
        %v701 = vperm.slane %v693, %v700
        %v702 = vrot.slane %v697, 4
        %v703 = vsel %vm678, %v702, %v685
        %v704 = vrot.slane %v685, 4
        %v705 = vsel %vm678, %v697, %v704
        %v707 = vunpack.c.l.s4 1934713408
        %v708 = vunpack.c.0.s8 %v707
        %v709 = vperm.slane %v703, %v708
        %v711 = vunpack.c.l.s4 1934713408
        %v712 = vunpack.c.0.s8 %v711
        %v713 = vperm.slane %v705, %v712
        %v714 = vrot.slane %v701, 4
        %v715 = vsel %vm678, %v714, %v689
        %v716 = vrot.slane %v689, 4
        %v717 = vsel %vm678, %v701, %v716
        %v719 = vunpack.c.l.s4 1934713408
        %v720 = vunpack.c.0.s8 %v719
        %v721 = vperm.slane %v715, %v720
        %v723 = vunpack.c.l.s4 1934713408
        %v724 = vunpack.c.0.s8 %v723
        %v725 = vperm.slane %v717, %v724
        %v726 = vrot.slane %v709, 4
        %v727 = vsel %vm678, 0.0, %v726
        %v728 = vrot.slane %v713, 4
        %v729 = vsel %vm678, 0.0, %v728
        %v730 = vrot.slane %v721, 4
        %v731 = vsel %vm678, 0.0, %v730
        %v732 = vrot.slane %v725, 4
        %v733 = vsel %vm678, 0.0, %v732
        %v734 = vsel %vm678, %v728, %v709
        %v736 = vunpack.c.l.s4 1983009808
        %v737 = vunpack.c.0.s8 %v736
        %v738 = vperm.slane %v734, %v737
        %v739 = vrot.slane %v729, 4
        %v740 = vsel %vm678, %v739, %v727
        %v742 = vunpack.c.l.s4 1983009808
        %v743 = vunpack.c.0.s8 %v742
        %v744 = vperm.slane %v740, %v743
        %v745 = vsel %vm678, %v732, %v721
        %v747 = vunpack.c.l.s4 1983009808
        %v748 = vunpack.c.0.s8 %v747
        %v749 = vperm.slane %v745, %v748
        %v750 = vrot.slane %v733, 4
        %v751 = vsel %vm678, %v750, %v731
        %v753 = vunpack.c.l.s4 1983009808
        %v754 = vunpack.c.0.s8 %v753
        %v755 = vperm.slane %v751, %v754
        %v756 = vrot.slane %v744, 4
        %v757 = vsel %vm678, %v756, %v738
        %v758 = vrot.slane %v738, 4
        %v759 = vsel %vm678, %v744, %v758
        %v761 = vunpack.c.l.s4 1934713408
        %v762 = vunpack.c.0.s8 %v761
        %v763 = vperm.slane %v757, %v762
        %v765 = vunpack.c.l.s4 1934713408
        %v766 = vunpack.c.0.s8 %v765
        %v767 = vperm.slane %v759, %v766
        %v768 = vrot.slane %v755, 4
        %v769 = vsel %vm678, %v768, %v749
        %v770 = vrot.slane %v749, 4
        %v771 = vsel %vm678, %v755, %v770
        %v773 = vunpack.c.l.s4 1934713408
        %v774 = vunpack.c.0.s8 %v773
        %v775 = vperm.slane %v769, %v774
        %v777 = vunpack.c.l.s4 1934713408
        %v778 = vunpack.c.0.s8 %v777
        %v779 = vperm.slane %v771, %v778
        %v780 = vrot.slane %v775, 4
        %v781 = vsel %vm678, %v780, %v763
        %v782 = vrot.slane %v763, 4
        %v783 = vsel %vm678, %v775, %v782
        %v784 = vrot.slane %v779, 4
        %v785 = vsel %vm678, %v784, %v767
        %v786 = vrot.slane %v767, 4
        %v787 = vsel %vm678, %v779, %v786
        %v788 = vpack.c.bf16 %v781, %v781
        %v789 = vpack.c.bf16 %v783, %v783
        %v790 = vpack.c.bf16 %v785, %v785
        %v791 = vpack.c.bf16 %v787, %v787
        %793 = vrot.lane.b32.xlu0 %v632, 120
        %v794 = vpop.permute.xlu0 %793
        %796 = vrot.lane.b32.xlu0 %v632, 112
        %v797 = vpop.permute.xlu0 %796
        %799 = vrot.lane.b32.xlu0 %v632, 104
        %v800 = vpop.permute.xlu0 %799
        %v802 = vrot.slane %v797, 4
        %v803 = vsel %vm678, %v802, %v632
        %v805 = vunpack.c.l.s4 1983009808
        %v806 = vunpack.c.0.s8 %v805
        %v807 = vperm.slane %v803, %v806
        %v808 = vrot.slane %v800, 4
        %v809 = vsel %vm678, %v808, %v794
        %v811 = vunpack.c.l.s4 1983009808
        %v812 = vunpack.c.0.s8 %v811
        %v813 = vperm.slane %v809, %v812
        %v814 = vrot.slane %v813, 4
        %v815 = vsel %vm678, %v814, %v807
        %v816 = vrot.slane %v807, 4
        %v817 = vsel %vm678, %v813, %v816
        %v819 = vunpack.c.l.s4 1934713408
        %v820 = vunpack.c.0.s8 %v819
        %v821 = vperm.slane %v815, %v820
        %v823 = vunpack.c.l.s4 1934713408
        %v824 = vunpack.c.0.s8 %v823
        %v825 = vperm.slane %v817, %v824
        %v826 = vrot.slane %v821, 4
        %v827 = vsel %vm678, 0.0, %v826
        %v828 = vrot.slane %v825, 4
        %v829 = vsel %vm678, 0.0, %v828
        %v830 = vsel %vm678, %v828, %v821
        %v832 = vunpack.c.l.s4 1983009808
        %v833 = vunpack.c.0.s8 %v832
        %v834 = vperm.slane %v830, %v833
        %v835 = vrot.slane %v829, 4
        %v836 = vsel %vm678, %v835, %v827
        %v838 = vunpack.c.l.s4 1983009808
        %v839 = vunpack.c.0.s8 %v838
        %v840 = vperm.slane %v836, %v839
        %v841 = vrot.slane %v840, 4
        %v842 = vsel %vm678, %v841, %v834
        %v843 = vrot.slane %v834, 4
        %v844 = vsel %vm678, %v840, %v843
        %v846 = vunpack.c.l.s4 1934713408
        %v847 = vunpack.c.0.s8 %v846
        %v848 = vperm.slane %v842, %v847
        %v850 = vunpack.c.l.s4 1934713408
        %v851 = vunpack.c.0.s8 %v850
        %v852 = vperm.slane %v844, %v851
        %v853 = vrot.slane %v848, 4
        %v854 = vsel %vm678, 0.0, %v853
        %v855 = vrot.slane %v852, 4
        %v856 = vsel %vm678, 0.0, %v855
        %v857 = vpack.c.bf16 %v848, %v848
        %v858 = vpack.c.bf16 %v854, %v854
        %v859 = vpack.c.bf16 %v852, %v852
        %v860 = vpack.c.bf16 %v856, %v856
        %862 = vrot.lane.b32.xlu0 %v664, 120
        %v863 = vpop.permute.xlu0 %862
        %865 = vrot.lane.b32.xlu0 %v664, 112
        %v866 = vpop.permute.xlu0 %865
        %868 = vrot.lane.b32.xlu0 %v664, 104
        %v869 = vpop.permute.xlu0 %868
        %v871 = vrot.slane %v866, 4
        %v872 = vsel %vm678, %v871, %v664
        %v874 = vunpack.c.l.s4 1983009808
        %v875 = vunpack.c.0.s8 %v874
        %v876 = vperm.slane %v872, %v875
        %v877 = vrot.slane %v869, 4
        %v878 = vsel %vm678, %v877, %v863
        %v880 = vunpack.c.l.s4 1983009808
        %v881 = vunpack.c.0.s8 %v880
        %v882 = vperm.slane %v878, %v881
        %v883 = vrot.slane %v882, 4
        %v884 = vsel %vm678, %v883, %v876
        %v885 = vrot.slane %v876, 4
        %v886 = vsel %vm678, %v882, %v885
        %v888 = vunpack.c.l.s4 1934713408
        %v889 = vunpack.c.0.s8 %v888
        %v890 = vperm.slane %v884, %v889
        %v892 = vunpack.c.l.s4 1934713408
        %v893 = vunpack.c.0.s8 %v892
        %v894 = vperm.slane %v886, %v893
        %v895 = vrot.slane %v890, 4
        %v896 = vsel %vm678, 0.0, %v895
        %v897 = vrot.slane %v894, 4
        %v898 = vsel %vm678, 0.0, %v897
        %v899 = vsel %vm678, %v897, %v890
        %v901 = vunpack.c.l.s4 1983009808
        %v902 = vunpack.c.0.s8 %v901
        %v903 = vperm.slane %v899, %v902
        %v904 = vrot.slane %v898, 4
        %v905 = vsel %vm678, %v904, %v896
        %v907 = vunpack.c.l.s4 1983009808
        %v908 = vunpack.c.0.s8 %v907
        %v909 = vperm.slane %v905, %v908
        %v910 = vrot.slane %v909, 4
        %v911 = vsel %vm678, %v910, %v903
        %v912 = vrot.slane %v903, 4
        %v913 = vsel %vm678, %v909, %v912
        %v915 = vunpack.c.l.s4 1934713408
        %v916 = vunpack.c.0.s8 %v915
        %v917 = vperm.slane %v911, %v916
        %v919 = vunpack.c.l.s4 1934713408
        %v920 = vunpack.c.0.s8 %v919
        %v921 = vperm.slane %v913, %v920
        %v922 = vrot.slane %v917, 4
        %v923 = vsel %vm678, 0.0, %v922
        %v924 = vrot.slane %v921, 4
        %v925 = vsel %vm678, 0.0, %v924
        %v926 = vpack.c.bf16 %v917, %v917
        %v927 = vpack.c.bf16 %v923, %v923
        %v928 = vpack.c.bf16 %v921, %v921
        %v929 = vpack.c.bf16 %v925, %v925
        %vm930 = vcmask 64512
        %v932 = vsel %vm930, %v788, 0
        %v935 = vsel %vm930, %v857, 0
        %937 = vmatpush.bf16.xpose.msra.mxu0 0
        %938 = vmatpush.bf16.xpose.msra.mxu0 0
        %939 = vmatpush.bf16.xpose.msra.mxu0 0
        %940 = vmatpush.bf16.xpose.msra.mxu0 0
        %941 = vmatpush.bf16.xpose.msra.mxu0 0
        %942 = vmatpush.bf16.xpose.msra.mxu0 0
        %943 = vmatpush.bf16.xpose.msra.mxu0 0
        %944 = vmatpush.bf16.xpose.msra.mxu0 %v935
        %945 = vmatmul.bf16.gmra.mxu0 %v932
        %v946 = vpop.f32.mrf.mxu0
        %v947 = vadd.f32 0.0, %v946
        %v948 = vpop.f32.mrf.mxu0
        %949 = vdwg.mxu0
        %v951 = vsel %vm930, %v789, 0
        %v954 = vsel %vm930, %v858, 0
        %956 = vmatpush.bf16.xpose.msra.mxu0 0
        %957 = vmatpush.bf16.xpose.msra.mxu0 0
        %958 = vmatpush.bf16.xpose.msra.mxu0 0
        %959 = vmatpush.bf16.xpose.msra.mxu0 0
        %960 = vmatpush.bf16.xpose.msra.mxu0 0
        %961 = vmatpush.bf16.xpose.msra.mxu0 0
        %962 = vmatpush.bf16.xpose.msra.mxu0 0
        %963 = vmatpush.bf16.xpose.msra.mxu0 %v954
        %964 = vmatmul.bf16.gmra.mxu0 %v951
        %v965 = vpop.f32.mrf.mxu0
        %v966 = vadd.f32 0.0, %v965
        %v967 = vpop.f32.mrf.mxu0
        %968 = vdwg.mxu0
        %v970 = vsel %vm930, %v790, 0
        %v973 = vsel %vm930, %v859, 0
        %975 = vmatpush.bf16.xpose.msra.mxu0 0
        %976 = vmatpush.bf16.xpose.msra.mxu0 0
        %977 = vmatpush.bf16.xpose.msra.mxu0 0
        %978 = vmatpush.bf16.xpose.msra.mxu0 0
        %979 = vmatpush.bf16.xpose.msra.mxu0 0
        %980 = vmatpush.bf16.xpose.msra.mxu0 0
        %981 = vmatpush.bf16.xpose.msra.mxu0 0
        %982 = vmatpush.bf16.xpose.msra.mxu0 %v973
        %983 = vmatmul.bf16.gmra.mxu0 %v970
        %v984 = vpop.f32.mrf.mxu0
        %v985 = vadd.f32 0.0, %v984
        %v986 = vpop.f32.mrf.mxu0
        %987 = vdwg.mxu0
        %v989 = vsel %vm930, %v791, 0
        %v992 = vsel %vm930, %v860, 0
        %994 = vmatpush.bf16.xpose.msra.mxu0 0
        %995 = vmatpush.bf16.xpose.msra.mxu0 0
        %996 = vmatpush.bf16.xpose.msra.mxu0 0
        %997 = vmatpush.bf16.xpose.msra.mxu0 0
        %998 = vmatpush.bf16.xpose.msra.mxu0 0
        %999 = vmatpush.bf16.xpose.msra.mxu0 0
        %1000 = vmatpush.bf16.xpose.msra.mxu0 0
        %1001 = vmatpush.bf16.xpose.msra.mxu0 %v992
        %1002 = vmatmul.bf16.gmra.mxu0 %v989
        %v1003 = vpop.f32.mrf.mxu0
        %v1004 = vadd.f32 0.0, %v1003
        %v1005 = vpop.f32.mrf.mxu0
        %1006 = vdwg.mxu0
        %v1007 = vmul.f32 %v947, 0.35355338
        %v1008 = vmul.f32 %v966, 0.35355338
        %v1009 = vmul.f32 %v985, 0.35355338
        %v1010 = vmul.f32 %v1004, 0.35355338
        %vm1011 = vcmask 31744
        %v1012 = vsel %vm1011, %v1007, -inf
        %1013 = vmax.xlane.f32.xlu0 %v1012
        %v1014 = vpop.xlane.xlu0 %1013
        %v1015 = vsel %vm1011, %v1008, -inf
        %1016 = vmax.xlane.f32.xlu0 %v1015
        %v1017 = vpop.xlane.xlu0 %1016
        %v1018 = vsel %vm1011, %v1009, -inf
        %1019 = vmax.xlane.f32.xlu0 %v1018
        %v1020 = vpop.xlane.xlu0 %1019
        %v1021 = vsel %vm1011, %v1010, -inf
        %1022 = vmax.xlane.f32.xlu0 %v1021
        %v1023 = vpop.xlane.xlu0 %1022
        %v1024 = vsub.f32 %v1007, %v1014
        %v1025 = vsub.f32 %v1008, %v1017
        %v1026 = vsub.f32 %v1009, %v1020
        %v1027 = vsub.f32 %v1010, %v1023
        %v1028 = vmul.f32 %v1024, 1.442695
        %v1029 = vpow.pop %v1028
        %v1030 = vmul.f32 %v1025, 1.442695
        %v1031 = vpow.pop %v1030
        %v1032 = vmul.f32 %v1026, 1.442695
        %v1033 = vpow.pop %v1032
        %v1034 = vmul.f32 %v1027, 1.442695
        %v1035 = vpow.pop %v1034
        %v1036 = vsel %vm1011, %v1029, 0.0
        %1037 = vadd.xlane.f32.xlu0 %v1036
        %v1038 = vpop.xlane.xlu0 %1037
        %v1039 = vsel %vm1011, %v1031, 0.0
        %1040 = vadd.xlane.f32.xlu0 %v1039
        %v1041 = vpop.xlane.xlu0 %1040
        %v1042 = vsel %vm1011, %v1033, 0.0
        %1043 = vadd.xlane.f32.xlu0 %v1042
        %v1044 = vpop.xlane.xlu0 %1043
        %v1045 = vsel %vm1011, %v1035, 0.0
        %1046 = vadd.xlane.f32.xlu0 %v1045
        %v1047 = vpop.xlane.xlu0 %1046
        %v1048 = vrcp.pop %v1038
        %v1049 = vrcp.pop %v1041
        %v1050 = vrcp.pop %v1044
        %v1051 = vrcp.pop %v1047
        %v1052 = vmul.f32 %v1029, %v1048
        %v1053 = vmul.f32 %v1031, %v1049
        %v1054 = vmul.f32 %v1033, %v1050
        %v1055 = vmul.f32 %v1035, %v1051
        %v1056 = vpack.c.bf16 %v1052, %v1052
        %v1057 = vpack.c.bf16 %v1053, %v1053
        %v1058 = vpack.c.bf16 %v1054, %v1054
        %v1059 = vpack.c.bf16 %v1055, %v1055
        %v1061 = vsel %vm1011, %v1056, 0
        %vm1063 = vcmask 1041408
        %v1065 = vsel %vm1063, %v926, 0
        %1067 = vmatpush.bf16.msra.mxu0 0
        %1068 = vmatpush.bf16.msra.mxu0 0
        %1069 = vmatpush.bf16.msra.mxu0 0
        %1070 = vmatpush.bf16.msra.mxu0 0
        %1071 = vmatpush.bf16.msra.mxu0 0
        %1072 = vmatpush.bf16.msra.mxu0 0
        %1073 = vmatpush.bf16.msra.mxu0 0
        %1074 = vmatpush.bf16.msra.mxu0 %v1065
        %1075 = vmatmul.bf16.gmra.mxu0 %v1061
        %v1076 = vpop.f32.mrf.mxu0
        %v1077 = vadd.f32 0.0, %v1076
        %v1078 = vpop.f32.mrf.mxu0
        %1079 = vdwg.mxu0
        %v1081 = vsel %vm1011, %v1057, 0
        %v1084 = vsel %vm1063, %v927, 0
        %1086 = vmatpush.bf16.msra.mxu0 0
        %1087 = vmatpush.bf16.msra.mxu0 0
        %1088 = vmatpush.bf16.msra.mxu0 0
        %1089 = vmatpush.bf16.msra.mxu0 0
        %1090 = vmatpush.bf16.msra.mxu0 0
        %1091 = vmatpush.bf16.msra.mxu0 0
        %1092 = vmatpush.bf16.msra.mxu0 0
        %1093 = vmatpush.bf16.msra.mxu0 %v1084
        %1094 = vmatmul.bf16.gmra.mxu0 %v1081
        %v1095 = vpop.f32.mrf.mxu0
        %v1096 = vadd.f32 0.0, %v1095
        %v1097 = vpop.f32.mrf.mxu0
        %1098 = vdwg.mxu0
        %v1100 = vsel %vm1011, %v1058, 0
        %v1103 = vsel %vm1063, %v928, 0
        %1105 = vmatpush.bf16.msra.mxu0 0
        %1106 = vmatpush.bf16.msra.mxu0 0
        %1107 = vmatpush.bf16.msra.mxu0 0
        %1108 = vmatpush.bf16.msra.mxu0 0
        %1109 = vmatpush.bf16.msra.mxu0 0
        %1110 = vmatpush.bf16.msra.mxu0 0
        %1111 = vmatpush.bf16.msra.mxu0 0
        %1112 = vmatpush.bf16.msra.mxu0 %v1103
        %1113 = vmatmul.bf16.gmra.mxu0 %v1100
        %v1114 = vpop.f32.mrf.mxu0
        %v1115 = vadd.f32 0.0, %v1114
        %v1116 = vpop.f32.mrf.mxu0
        %1117 = vdwg.mxu0
        %v1119 = vsel %vm1011, %v1059, 0
        %v1122 = vsel %vm1063, %v929, 0
        %1124 = vmatpush.bf16.msra.mxu0 0
        %1125 = vmatpush.bf16.msra.mxu0 0
        %1126 = vmatpush.bf16.msra.mxu0 0
        %1127 = vmatpush.bf16.msra.mxu0 0
        %1128 = vmatpush.bf16.msra.mxu0 0
        %1129 = vmatpush.bf16.msra.mxu0 0
        %1130 = vmatpush.bf16.msra.mxu0 0
        %1131 = vmatpush.bf16.msra.mxu0 %v1122
        %1132 = vmatmul.bf16.gmra.mxu0 %v1119
        %v1133 = vpop.f32.mrf.mxu0
        %v1134 = vadd.f32 0.0, %v1133
        %v1135 = vpop.f32.mrf.mxu0
        %1136 = vdwg.mxu0
        %v1137 = vrot.slane %v1115, 4
        %v1138 = vsel %vm678, %v1137, %v1077
        %v1139 = vrot.slane %v1077, 4
        %v1140 = vsel %vm678, %v1115, %v1139
        %v1142 = vunpack.c.l.s4 1983009808
        %v1143 = vunpack.c.0.s8 %v1142
        %v1144 = vperm.slane %v1138, %v1143
        %v1146 = vunpack.c.l.s4 1983009808
        %v1147 = vunpack.c.0.s8 %v1146
        %v1148 = vperm.slane %v1140, %v1147
        %v1149 = vrot.slane %v1134, 4
        %v1150 = vsel %vm678, %v1149, %v1096
        %v1151 = vrot.slane %v1096, 4
        %v1152 = vsel %vm678, %v1134, %v1151
        %v1154 = vunpack.c.l.s4 1983009808
        %v1155 = vunpack.c.0.s8 %v1154
        %v1156 = vperm.slane %v1150, %v1155
        %v1158 = vunpack.c.l.s4 1983009808
        %v1159 = vunpack.c.0.s8 %v1158
        %v1160 = vperm.slane %v1152, %v1159
        %v1161 = vrot.slane %v1156, 4
        %v1162 = vsel %vm678, %v1161, %v1144
        %v1163 = vrot.slane %v1144, 4
        %v1164 = vsel %vm678, %v1156, %v1163
        %v1166 = vunpack.c.l.s4 1934713408
        %v1167 = vunpack.c.0.s8 %v1166
        %v1168 = vperm.slane %v1162, %v1167
        %v1170 = vunpack.c.l.s4 1934713408
        %v1171 = vunpack.c.0.s8 %v1170
        %v1172 = vperm.slane %v1164, %v1171
        %v1173 = vrot.slane %v1160, 4
        %v1174 = vsel %vm678, %v1173, %v1148
        %v1175 = vrot.slane %v1148, 4
        %v1176 = vsel %vm678, %v1160, %v1175
        %v1178 = vunpack.c.l.s4 1934713408
        %v1179 = vunpack.c.0.s8 %v1178
        %v1180 = vperm.slane %v1174, %v1179
        %v1182 = vunpack.c.l.s4 1934713408
        %v1183 = vunpack.c.0.s8 %v1182
        %v1184 = vperm.slane %v1176, %v1183
        %v1185 = vrot.slane %v1168, 4
        %v1186 = vsel %vm678, 0.0, %v1185
        %v1187 = vrot.slane %v1172, 4
        %v1188 = vsel %vm678, 0.0, %v1187
        %v1189 = vrot.slane %v1180, 4
        %v1190 = vsel %vm678, 0.0, %v1189
        %v1191 = vrot.slane %v1184, 4
        %v1192 = vsel %vm678, 0.0, %v1191
        %v1193 = vsel %vm678, %v1187, %v1168
        %v1195 = vunpack.c.l.s4 1983009808
        %v1196 = vunpack.c.0.s8 %v1195
        %v1197 = vperm.slane %v1193, %v1196
        %v1198 = vrot.slane %v1188, 4
        %v1199 = vsel %vm678, %v1198, %v1186
        %v1201 = vunpack.c.l.s4 1983009808
        %v1202 = vunpack.c.0.s8 %v1201
        %v1203 = vperm.slane %v1199, %v1202
        %v1204 = vsel %vm678, %v1191, %v1180
        %v1206 = vunpack.c.l.s4 1983009808
        %v1207 = vunpack.c.0.s8 %v1206
        %v1208 = vperm.slane %v1204, %v1207
        %v1209 = vrot.slane %v1192, 4
        %v1210 = vsel %vm678, %v1209, %v1190
        %v1212 = vunpack.c.l.s4 1983009808
        %v1213 = vunpack.c.0.s8 %v1212
        %v1214 = vperm.slane %v1210, %v1213
        %v1215 = vrot.slane %v1203, 4
        %v1216 = vsel %vm678, %v1215, %v1197
        %v1217 = vrot.slane %v1197, 4
        %v1218 = vsel %vm678, %v1203, %v1217
        %v1220 = vunpack.c.l.s4 1934713408
        %v1221 = vunpack.c.0.s8 %v1220
        %v1222 = vperm.slane %v1216, %v1221
        %v1224 = vunpack.c.l.s4 1934713408
        %v1225 = vunpack.c.0.s8 %v1224
        %v1226 = vperm.slane %v1218, %v1225
        %v1227 = vrot.slane %v1214, 4
        %v1228 = vsel %vm678, %v1227, %v1208
        %v1229 = vrot.slane %v1208, 4
        %v1230 = vsel %vm678, %v1214, %v1229
        %v1232 = vunpack.c.l.s4 1934713408
        %v1233 = vunpack.c.0.s8 %v1232
        %v1234 = vperm.slane %v1228, %v1233
        %v1236 = vunpack.c.l.s4 1934713408
        %v1237 = vunpack.c.0.s8 %v1236
        %v1238 = vperm.slane %v1230, %v1237
        %v1239 = vrot.slane %v1234, 4
        %v1240 = vsel %vm678, %v1239, %v1222
        %v1241 = vrot.slane %v1222, 4
        %v1242 = vsel %vm678, %v1234, %v1241
        %v1243 = vrot.slane %v1238, 4
        %v1244 = vsel %vm678, %v1243, %v1226
        %v1245 = vrot.slane %v1226, 4
        %v1246 = vsel %vm678, %v1238, %v1245
        %1248 = vrot.lane.b32.xlu0 %v1242, 8
        %v1249 = vpop.permute.xlu0 %1248
        %1252 = vrot.lane.b32.xlu0 %v1244, 16
        %v1253 = vpop.permute.xlu0 %1252
        %1256 = vrot.lane.b32.xlu0 %v1246, 24
        %v1257 = vpop.permute.xlu0 %1256
        %v1259 = vsel %vm930, %v1240, %v1249
        %vm1260 = vcmask 130048
        %v1261 = vsel %vm1260, %v1259, %v1253
        %vm1262 = vcmask 195584
        %v1263 = vsel %vm1262, %v1261, %v1257
        %v1264 = vpack.c.bf16 %v1263, %v1263
        %v1265 = vld [vmem:[#allocation11] sm:$0xf]
        %v1266 = vld [vmem:[#allocation11 + $0x4] sm:$0xf]
        %v1267 = vld [vmem:[#allocation11 + $0x8] sm:$0xf]
        %v1268 = vld [vmem:[#allocation11 + $0xc] sm:$0xf]
        %v1270 = vperm.slane %v559, 0
        %v1276 = vunpack.c.l.b16 %v1265
        %v1277 = vunpack.c.l.b16 %v1266
        %v1278 = vunpack.c.l.b16 %v1267
        %v1279 = vunpack.c.l.b16 %v1268
        %v1280 = vpack.c.b16 %v1277, %v1276
        %v1281 = vpack.c.b16 %v1279, %v1278
        %v1285 = vsel %vm583, %v1264, 0
        %1287 = vmatpush.bf16.msra.mxu0 0
        %1288 = vmatpush.bf16.msra.mxu0 0
        %1289 = vmatpush.bf16.msra.mxu0 0
        %1290 = vmatpush.bf16.msra.mxu0 0
        %1291 = vmatpush.bf16.msra.mxu0 0
        %1292 = vmatpush.bf16.msra.mxu0 0
        %1293 = vmatpush.bf16.msra.mxu0 %v1281
        %1294 = vmatpush.bf16.msra.mxu0 %v1280
        %1295 = vmatmul.bf16.gmra.mxu0 %v1285
        %v1296 = vpop.f32.mrf.mxu0
        %v1297 = vadd.f32 %v1270, %v1296
        %v1298 = vpop.f32.mrf.mxu0
        %1299 = vdwg.mxu0
        %v1300 = vadd.f32 %v554, %v1297
        %v1301 = vsel %vm583, %v1300, 0.0
        %1302 = vadd.xlane.f32.xlu0 %v1301
        %v1303 = vpop.xlane.xlu0 %1302
        %v1304 = vrcp.pop 32.0
        %v1305 = vmul.f32 32.0, %v1304
        %v1306 = vsub.f32 1.0, %v1305
        %v1307 = vmul.f32 %v1304, %v1306
        %v1308 = vadd.f32 %v1304, %v1307
        %vm1309 = vweird.f32 %v1304
        %v1310 = vsel %vm1309, %v1304, %v1308
        %v1311 = vmul.f32 %v1303, %v1310
        %v1312 = vsub.f32 %v1300, %v1311
        %v1313 = vmul.f32 %v1312, %v1312
        %v1314 = vsel %vm583, %v1313, 0.0
        %1315 = vadd.xlane.f32.xlu0 %v1314
        %v1316 = vpop.xlane.xlu0 %1315
        %v1317 = vmul.f32 %v1316, %v1310
        %v1318 = vadd.f32 %v1317, 1e-05
        %v1319 = vrsqrt.pop %v1318
        %v1320 = vmul.f32 %v1319, %v1318
        %v1321 = vmul.f32 %v1320, %v1319
        %v1322 = vmul.f32 0.5, %v1321
        %v1323 = vsub.f32 1.5, %v1322
        %v1324 = vmul.f32 %v1319, %v1323
        %vm1325 = vweird.f32 %v1318
        %vm1326 = vweird.f32 %v1319
        %vm1327 = vmor %vm1325, %vm1326
        %v1328 = vsel %vm1327, %v1319, %v1324
        %v1329 = vmul.f32 %v1312, %v1328
        %v1331 = vperm.slane %v560, 0
        %v1333 = vmul.f32 %v1329, %v1331
        %v1335 = vperm.slane %v561, 0
        %v1337 = vadd.f32 %v1333, %v1335
        %1338 = vst.msk [vmem:[%s552] sm:$0xff] %vm583, %v1337
        %s1339 = sand.u32 %s320, 1
        %s1340 = scalar_lea.sflag [#allocation4], %s1339
        %s1341 = sand.u32 %s320, 1
        %s1342 = smul.addr %s1341, 8
        %s1343 = scalar_lea.vmem [#allocation13], %s1342
        // Predicated region
        $region93: #{tpu_custom_call.1} parent=67 // pred_check
          %p1344 = pneg %p330
        $region94: #{tpu_custom_call.1} parent=67 // pred_check_branch
          %1346 = sbr.rel (%p1344) target = $region96
        $region95: #{tpu_custom_call.1} parent=67 // pred_region
          %1348 = vsyncadd %s1340, 0
          %s1349 = sadd.s32 %s39, %s38
          %s1350 = smul.addr %s1349, 8
          %s1351 = scalar_lea.hbm %s12, %s1350
          %s1353 = sshll.u32 %s1343, 4
          %s1354 = int_to_ptr.vmem [resolvable:$true] %s1353
          %s1355 = sshll.u32 %s1351, 4
          %s1356 = int_to_ptr.hbm [resolvable:$true] %s1355
          %1358 = dma.vmem_to_hbm [thread:$0]  %s1354, 128, %s1356, %s1340
        $region96: #{tpu_custom_call.1} parent=67 // pred_fallthru
          _
      $region68: #{tpu_custom_call.1} parent=5 // pred_fallthru
        _
      %p1359 = scmp.le.s32.totalorder 2, %s29
      // Predicated region
      $region97: #{tpu_custom_call.1} parent=5 // pred_check
        %p1360 = pneg %p1359
      $region98: #{tpu_custom_call.1} parent=5 // pred_check_branch
        %1362 = sbr.rel (%p1360) target = $region100
      $region99: #{tpu_custom_call.1} parent=5 // pred_region
        %s1363 = ssub.s32 %s29, 2
        // Predicated region
        $region101: #{tpu_custom_call.1} parent=99 // pred_check
          %p1364 = pneg %p336
        $region102: #{tpu_custom_call.1} parent=99 // pred_check_branch
          %1366 = sbr.rel (%p1364) target = $region104
        $region103: #{tpu_custom_call.1} parent=99 // pred_region
          %s1367 = sand.u32 %s321, 1
          %s1368 = scalar_lea.sflag [#allocation4], %s1367
          %s1369 = sand.u32 %s321, 1
          %s1370 = smul.addr %s1369, 8
          %s1371 = scalar_lea.vmem [#allocation13], %s1370
          %1373 = dma.done %s1368, 128
        $region104: #{tpu_custom_call.1} parent=99 // pred_fallthru
          _
      $region100: #{tpu_custom_call.1} parent=5 // pred_fallthru
        _
    $region6: #{tpu_custom_call.1} parent=1 // loop_footer
      %s33 = sadd.s32 1, %s29
    $region7: #{tpu_custom_call.1} parent=1 // loop_footer_branch
      %28 = sbr.rel target = $region3
    $region8: #{tpu_custom_call.1} parent=1 // loop_exit
      _
    %1374 = vsyncpa [#allocation3], 1
    %s1375 = scalar_lea.sflag [#allocation3], 1
    %1376 = vsyncpa %s1375, 1
    %1377 = vsyncpa [#allocation6], 1
    %s1378 = scalar_lea.sflag [#allocation6], 1
    %1379 = vsyncpa %s1378, 1
    %1380 = vsyncpa [#allocation9], 1
    %1381 = vsyncpa [#allocation12], 1
    %1382 = vsyncpa [#allocation4], 1
    %s1383 = scalar_lea.sflag [#allocation4], 1
    %1384 = vsyncpa %s1383, 1

</llo_original>
